<compile_context>
chip_gen: v5e
topology: v5e:2x2
jax: 0.10.0
libtpu: 0.0.40
codegen_flags: <defaults>
</compile_context>

<pallas_src>
import jax
import jax.numpy as jnp
import numpy as np
from jax import lax
from jax.experimental import pallas as pl
from jax.experimental.pallas import tpu as pltpu

# ----------------------------- model config (small, lane-aligned) ---------------
VOCAB = 128
TYPE_VOCAB = 2
MAX_POS = 32
H = 128            # hidden size
NH = 4             # attention heads
DH = H // NH       # 32
FF = 256           # intermediate size
LAYERS = 2
CODE_LEN = 128     # code_length (constructor arg of TextNet)
B = 2              # batch
S = 8              # sequence length
T = B * S          # 16 -- whole batch processed as one (T, H) slab
EPS = 1e-12        # BERT layernorm eps
NEG = -1e9         # additive mask value


# ----------------------------- math helpers (f32, VPU/EUP friendly) --------------
def _gelu(x):
    c = 0.7978845608028654  # sqrt(2/pi)
    return 0.5 * x * (1.0 + jnp.tanh(c * (x + 0.044715 * x * x * x)))


def _ln(x, gb):
    g = gb[0:1, :]
    b = gb[1:2, :]
    mu = jnp.mean(x, axis=-1, keepdims=True)
    var = jnp.mean((x - mu) * (x - mu), axis=-1, keepdims=True)
    return (x - mu) * lax.rsqrt(var + EPS) * g + b


def _bf16(x):
    return x.astype(jnp.bfloat16)


# ----------------------------- fused encoder kernel ------------------------------
def _textnet_kernel(tok_ref, seg_ref, maskf_ref,
                    word_ref, pos_ref, type_ref, embln_ref,
                    bmask_ref, hmask_ref,
                    wqkv_ref, bqkv_ref, wo_ref, bo_ref, ln1_ref,
                    w1_ref, b1_ref, w2_ref, b2_ref, ln2_ref,
                    fcw_ref, fcb_ref,
                    out_ref, x_ref):
    """grid=(LAYERS,): step l runs encoder layer l on the resident (T,H) slab.
    Step 0 additionally builds the embeddings; the last step runs CLS->fc->tanh."""
    l = pl.program_id(0)

    # ---- step 0: embeddings (word: one-hot MXU gather, type: select) + LN ----
    @pl.when(l == 0)
    def _embed():
        tok = tok_ref[...]                                       # (T, 1) int32
        segf = seg_ref[...].astype(jnp.float32)                  # (T, 1) in {0,1}
        iota_v = lax.broadcasted_iota(jnp.int32, (T, VOCAB), 1)
        onehot = jnp.where(tok == iota_v, 1.0, 0.0)              # (T, VOCAB) f32
        word = jnp.dot(onehot, word_ref[...],
                       preferred_element_type=jnp.float32)       # exact row select
        ttab = type_ref[...]                                     # (2, H)
        typ = ttab[0:1, :] * (1.0 - segf) + ttab[1:2, :] * segf  # (T, H)
        emb = word + pos_ref[...] + typ
        x_ref[...] = _ln(emb, embln_ref[...])

    # ---- additive attention mask: block-diag batch mask + padded-key mask ----
    # (NH*T, T): per-head row blocks stacked along sublanes; recomputed per step
    # from the resident (1, T) raw mask (a handful of VPU ops, no HBM traffic).
    mask_tiled = bmask_ref[...] + (1.0 - maskf_ref[...]) * NEG   # (NH*T, T)
    head_mask = hmask_ref[...]                                   # (NH*T, H) 0/1

    # ---- one encoder layer per grid step ----
    x = x_ref[...]                                               # (T, H) f32
    scale = 1.0 / float(DH) ** 0.5

    # fused QKV projection: single (T,H) @ (H,3H) bf16 matmul, f32 accumulate
    qkv = (jnp.dot(_bf16(x), wqkv_ref[0], preferred_element_type=jnp.float32)
           + bqkv_ref[0])                                        # (T, 3H)
    q = qkv[:, 0:H]
    k = qkv[:, H:2 * H]
    v = qkv[:, 2 * H:3 * H]

    # all-head scores in ONE matmul: heads stacked along sublanes.
    # qs row block h only keeps head-h lanes, so contracting over all H lanes
    # against the full K gives exactly Q_h @ K_h^T in row block h.
    qs = jnp.concatenate([q] * NH, axis=0) * head_mask           # (NH*T, H)
    scores = lax.dot_general(qs, k, (((1,), (1,)), ((), ())),
                             preferred_element_type=jnp.float32) # (NH*T, T)
    scores = scores * scale + mask_tiled

    # one fused softmax for all heads (exact divide per perf-review note)
    scores = scores - jnp.max(scores, axis=-1, keepdims=True)
    p = jnp.exp(scores)
    p = p / jnp.sum(p, axis=-1, keepdims=True)                   # (NH*T, T)

    # all-head context in ONE matmul, then head-select and merge along sublanes
    ctx_full = (jnp.dot(p, v, preferred_element_type=jnp.float32)
                * head_mask)                                     # (NH*T, H)
    ctx = ctx_full[0:T]
    for h in range(1, NH):
        ctx = ctx + ctx_full[h * T:(h + 1) * T]                  # (T, H) merged

    # output projection + residual + LN1
    attn = (jnp.dot(_bf16(ctx), wo_ref[0], preferred_element_type=jnp.float32)
            + bo_ref[0])
    x = _ln(x + attn, ln1_ref[0])

    # FFN (GELU) + residual + LN2
    ff = _gelu(jnp.dot(_bf16(x), w1_ref[0], preferred_element_type=jnp.float32)
               + b1_ref[0])
    ff = (jnp.dot(_bf16(ff), w2_ref[0], preferred_element_type=jnp.float32)
          + b2_ref[0])
    x = _ln(x + ff, ln2_ref[0])
    x_ref[...] = x

    # ---- last step: CLS tokens -> fc -> tanh (single lane-dense (B,C) store) ----
    @pl.when(l == pl.num_programs(0) - 1)
    def _head():
        cls = jnp.concatenate([x[b * S:b * S + 1, :] for b in range(B)], axis=0)
        out = (jnp.dot(_bf16(cls), fcw_ref[...],
                       preferred_element_type=jnp.float32) + fcb_ref[...])
        out_ref[...] = jnp.tanh(out)


# ----------------------------- pallas_call wrapper --------------------------------
_PACKED_ORDER = ("word_emb", "pos_tiled", "type_emb", "emb_ln",
                 "batch_mask", "head_mask",
                 "wqkv", "bqkv", "wo", "bo", "ln1",
                 "w1", "b1", "w2", "b2", "ln2", "fc_w", "fc_b")
_PER_LAYER = {"wqkv", "bqkv", "wo", "bo", "ln1", "w1", "b1", "w2", "b2", "ln2"}


def _rep_spec(shape):
    nd = len(shape)
    return pl.BlockSpec(shape, lambda l, _nd=nd: (0,) * _nd)


def _layer_spec(shape):
    nd = len(shape)
    return pl.BlockSpec((1,) + tuple(shape[1:]),
                        lambda l, _nd=nd: (l,) + (0,) * (_nd - 1))


def _cost_estimate(inputs):
    mm_per_layer = (2 * T * H * 3 * H            # fused QKV
                    + 2 * (NH * T) * H * T       # scores
                    + 2 * (NH * T) * T * H       # context
                    + 2 * T * H * H              # output proj
                    + 2 * T * H * FF + 2 * T * FF * H)  # FFN
    flops = LAYERS * mm_per_layer + 2 * T * VOCAB * H + 2 * B * H * CODE_LEN
    transc = LAYERS * (NH * T * T + T * FF) + B * CODE_LEN
    bytes_acc = sum(int(a.size) * a.dtype.itemsize for a in inputs) + B * CODE_LEN * 4
    return pl.CostEstimate(flops=int(flops), transcendentals=int(transc),
                           bytes_accessed=int(bytes_acc))


def textnet_forward(packed, tokens, segments, input_masks):
    """tokens/segments/input_masks: (B, S) int32 -> (B, CODE_LEN) f32."""
    tok = tokens.reshape(T, 1).astype(jnp.int32)
    seg = segments.reshape(T, 1).astype(jnp.int32)
    maskf = input_masks.reshape(1, T).astype(jnp.float32)

    weights = [packed[n] for n in _PACKED_ORDER]
    in_specs = [_rep_spec(tok.shape), _rep_spec(seg.shape), _rep_spec(maskf.shape)]
    for name, w in zip(_PACKED_ORDER, weights):
        in_specs.append(_layer_spec(w.shape) if name in _PER_LAYER
                        else _rep_spec(w.shape))

    return pl.pallas_call(
        _textnet_kernel,
        out_shape=jax.ShapeDtypeStruct((B, CODE_LEN), jnp.float32),
        grid=(LAYERS,),
        in_specs=in_specs,
        out_specs=pl.BlockSpec((B, CODE_LEN), lambda l: (0, 0)),
        scratch_shapes=[pltpu.VMEM((T, H), jnp.float32)],   # resident activation slab
        compiler_params=pltpu.CompilerParams(
            dimension_semantics=("arbitrary",)),             # layers are sequential
        cost_estimate=_cost_estimate([tok, seg, maskf] + weights),
    )(tok, seg, maskf, *weights)


# ----------------------------- parameter init / packing --------------------------
def init_params(key):
    def nrm(k, shape, scale=0.02):
        return scale * jax.random.normal(k, shape, dtype=jnp.float32)

    keys = jax.random.split(key, 8 + LAYERS)
    p = {
        "word_emb": nrm(keys[0], (VOCAB, H)),
        "pos_emb": nrm(keys[1], (MAX_POS, H)),
        "type_emb": nrm(keys[2], (TYPE_VOCAB, H)),
        "emb_ln_g": jnp.ones((H,), jnp.float32),
        "emb_ln_b": jnp.zeros((H,), jnp.float32),
        "fc_w": nrm(keys[3], (H, CODE_LEN)),
        "fc_b": jnp.zeros((CODE_LEN,), jnp.float32),
        "layers": [],
    }
    for li in range(LAYERS):
        lk = jax.random.split(keys[8 + li], 6)
        p["layers"].append({
            "wq": nrm(lk[0], (H, H)), "bq": jnp.zeros((H,), jnp.float32),
            "wk": nrm(lk[1], (H, H)), "bk": jnp.zeros((H,), jnp.float32),
            "wv": nrm(lk[2], (H, H)), "bv": jnp.zeros((H,), jnp.float32),
            "wo": nrm(lk[3], (H, H)), "bo": jnp.zeros((H,), jnp.float32),
            "ln1_g": jnp.ones((H,), jnp.float32), "ln1_b": jnp.zeros((H,), jnp.float32),
            "w1": nrm(lk[4], (H, FF)), "b1": jnp.zeros((FF,), jnp.float32),
            "w2": nrm(lk[5], (FF, H)), "b2": jnp.zeros((H,), jnp.float32),
            "ln2_g": jnp.ones((H,), jnp.float32), "ln2_b": jnp.zeros((H,), jnp.float32),
        })
    return p


def pack_params(p):
    """Stack per-layer weights (fusing Q|K|V), cast matmul weights to bf16, and
    precompute the constant block-diagonal masks."""
    def stack(f):
        return jnp.stack([f(lp) for lp in p["layers"]])

    bf = lambda a: a.astype(jnp.bfloat16)

    # constant masks (model-config constants, built once at pack time)
    r_q = (np.arange(NH * T) % T) // S            # query batch id per score row
    c_k = np.arange(T) // S                       # key batch id per score column
    batch_mask = np.where(r_q[:, None] == c_k[None, :], 0.0, NEG).astype(np.float32)
    r_h = np.arange(NH * T) // T                  # head id per stacked-score row
    c_h = np.arange(H) // DH                      # head id per hidden lane
    head_mask = (r_h[:, None] == c_h[None, :]).astype(np.float32)

    return {
        "word_emb": p["word_emb"],                                           # (V, H) f32
        "pos_tiled": jnp.tile(p["pos_emb"][:S], (B, 1)),                     # (T, H) f32
        "type_emb": p["type_emb"],                                           # (2, H) f32
        "emb_ln": jnp.stack([p["emb_ln_g"], p["emb_ln_b"]]),                 # (2, H) f32
        "batch_mask": jnp.asarray(batch_mask),                               # (NH*T, T)
        "head_mask": jnp.asarray(head_mask),                                 # (NH*T, H)
        "wqkv": bf(stack(lambda lp: jnp.concatenate(
            [lp["wq"], lp["wk"], lp["wv"]], axis=1))),                       # (L, H, 3H) bf16
        "bqkv": stack(lambda lp: jnp.concatenate(
            [lp["bq"], lp["bk"], lp["bv"]]).reshape(1, 3 * H)),              # (L, 1, 3H)
        "wo": bf(stack(lambda lp: lp["wo"])),                                # (L, H, H) bf16
        "bo": stack(lambda lp: lp["bo"].reshape(1, H)),
        "ln1": stack(lambda lp: jnp.stack([lp["ln1_g"], lp["ln1_b"]])),      # (L, 2, H)
        "w1": bf(stack(lambda lp: lp["w1"])),                                # (L, H, FF) bf16
        "b1": stack(lambda lp: lp["b1"].reshape(1, FF)),
        "w2": bf(stack(lambda lp: lp["w2"])),                                # (L, FF, H) bf16
        "b2": stack(lambda lp: lp["b2"].reshape(1, H)),
        "ln2": stack(lambda lp: jnp.stack([lp["ln2_g"], lp["ln2_b"]])),      # (L, 2, H)
        "fc_w": bf(p["fc_w"]),                                               # (H, C) bf16
        "fc_b": p["fc_b"].reshape(1, CODE_LEN),                              # (1, C)
    }


# ----------------------------- pure-JAX reference --------------------------------
def textnet_reference(params, tokens, segments, input_masks):
    bf, f32 = jnp.bfloat16, jnp.float32

    def mm(x, w):  # mirror the kernel's bf16 x bf16 matmul with f32 accumulation
        return jnp.dot(x.astype(bf), w.astype(bf), preferred_element_type=f32)

    def ln(x, g, b):
        mu = jnp.mean(x, axis=-1, keepdims=True)
        var = jnp.mean((x - mu) ** 2, axis=-1, keepdims=True)
        return (x - mu) * lax.rsqrt(var + EPS) * g + b

    emb = (params["word_emb"][tokens]
           + params["pos_emb"][jnp.arange(S)][None, :, :]
           + params["type_emb"][segments])                                   # (B, S, H)
    x = ln(emb.reshape(T, H), params["emb_ln_g"], params["emb_ln_b"])
    mask_add = (1.0 - input_masks.astype(f32)) * NEG                         # (B, S)

    for lp in params["layers"]:
        def heads(y):  # (T, H) -> (B, NH, S, DH)
            return y.reshape(B, S, NH, DH).transpose(0, 2, 1, 3)
        q = heads(mm(x, lp["wq"]) + lp["bq"])
        k = heads(mm(x, lp["wk"]) + lp["bk"])
        v = heads(mm(x, lp["wv"]) + lp["bv"])
        s = jnp.einsum("bhqd,bhkd->bhqk", q, k,
                       precision=lax.Precision.HIGHEST) / (DH ** 0.5)
        s = s + mask_add[:, None, None, :]
        p = jax.nn.softmax(s, axis=-1)
        ctx = jnp.einsum("bhqk,bhkd->bhqd", p, v, precision=lax.Precision.HIGHEST)
        ctx = ctx.transpose(0, 2, 1, 3).reshape(T, H)
        x = ln(x + mm(ctx, lp["wo"]) + lp["bo"], lp["ln1_g"], lp["ln1_b"])
        ff = _gelu(mm(x, lp["w1"]) + lp["b1"])
        ff = mm(ff, lp["w2"]) + lp["b2"]
        x = ln(x + ff, lp["ln2_g"], lp["ln2_b"])

    cls = x.reshape(B, S, H)[:, 0, :]
    return jnp.tanh(mm(cls, params["fc_w"]) + params["fc_b"])


# ----------------------------- main ------------------------------------------------
if __name__ == "__main__":
    key = jax.random.PRNGKey(0)
    kp, kt, ks = jax.random.split(key, 3)
    params = init_params(kp)
    packed = pack_params(params)

    tokens = jax.random.randint(kt, (B, S), 0, VOCAB, dtype=jnp.int32)
    segments = jax.random.randint(ks, (B, S), 0, TYPE_VOCAB, dtype=jnp.int32)
    # last two positions of batch element 1 are padding
    input_masks = jnp.ones((B, S), jnp.int32).at[1, -2:].set(0)

    fwd = jax.jit(textnet_forward)
    out = jax.block_until_ready(fwd(packed, tokens, segments, input_masks))
    assert out.shape == (B, CODE_LEN), out.shape

    ref = textnet_reference(params, tokens, segments, input_masks)
    err = float(jnp.max(jnp.abs(out - ref)))
    assert err < 3e-3, err

    print("KERNEL_OK")
</pallas_src>

<mosaic_0001>
module attributes {stable_mosaic.version = 11 : i64} {
  func.func @_textnet_kernel(%arg0: i32, %arg1: memref<16x1xi32, #tpu.memory_space<vmem>>, %arg2: memref<16x1xi32, #tpu.memory_space<vmem>>, %arg3: memref<1x16xf32, #tpu.memory_space<vmem>>, %arg4: memref<128x128xf32, #tpu.memory_space<vmem>>, %arg5: memref<16x128xf32, #tpu.memory_space<vmem>>, %arg6: memref<2x128xf32, #tpu.memory_space<vmem>>, %arg7: memref<2x128xf32, #tpu.memory_space<vmem>>, %arg8: memref<64x16xf32, #tpu.memory_space<vmem>>, %arg9: memref<64x128xf32, #tpu.memory_space<vmem>>, %arg10: memref<1x128x384xbf16, #tpu.memory_space<vmem>>, %arg11: memref<1x1x384xf32, #tpu.memory_space<vmem>>, %arg12: memref<1x128x128xbf16, #tpu.memory_space<vmem>>, %arg13: memref<1x1x128xf32, #tpu.memory_space<vmem>>, %arg14: memref<1x2x128xf32, #tpu.memory_space<vmem>>, %arg15: memref<1x128x256xbf16, #tpu.memory_space<vmem>>, %arg16: memref<1x1x256xf32, #tpu.memory_space<vmem>>, %arg17: memref<1x256x128xbf16, #tpu.memory_space<vmem>>, %arg18: memref<1x1x128xf32, #tpu.memory_space<vmem>>, %arg19: memref<1x2x128xf32, #tpu.memory_space<vmem>>, %arg20: memref<128x128xbf16, #tpu.memory_space<vmem>>, %arg21: memref<1x128xf32, #tpu.memory_space<vmem>>, %arg22: memref<2x128xf32, #tpu.memory_space<vmem>>, %arg23: memref<16x128xf32, #tpu.memory_space<vmem>>) attributes {dimension_semantics = [#tpu.dimension_semantics<arbitrary>], iteration_bounds = array<i64: 2>, scalar_prefetch = 0 : i64, scratch_operands = 1 : i64, tpu.core_type = #tpu.core_type<tc>, window_params = [{pipeline_mode = #tpu.pipeline_mode<synchronous>, transform_indices = @transform_0, window_bounds = array<i64: 16, 1>}, {pipeline_mode = #tpu.pipeline_mode<synchronous>, transform_indices = @transform_1, window_bounds = array<i64: 16, 1>}, {pipeline_mode = #tpu.pipeline_mode<synchronous>, transform_indices = @transform_2, window_bounds = array<i64: 1, 16>}, {pipeline_mode = #tpu.pipeline_mode<synchronous>, transform_indices = @transform_3, window_bounds = array<i64: 128, 128>}, {pipeline_mode = #tpu.pipeline_mode<synchronous>, transform_indices = @transform_4, window_bounds = array<i64: 16, 128>}, {pipeline_mode = #tpu.pipeline_mode<synchronous>, transform_indices = @transform_5, window_bounds = array<i64: 2, 128>}, {pipeline_mode = #tpu.pipeline_mode<synchronous>, transform_indices = @transform_6, window_bounds = array<i64: 2, 128>}, {pipeline_mode = #tpu.pipeline_mode<synchronous>, transform_indices = @transform_7, window_bounds = array<i64: 64, 16>}, {pipeline_mode = #tpu.pipeline_mode<synchronous>, transform_indices = @transform_8, window_bounds = array<i64: 64, 128>}, {transform_indices = @transform_9, window_bounds = array<i64: 1, 128, 384>}, {transform_indices = @transform_10, window_bounds = array<i64: 1, 1, 384>}, {transform_indices = @transform_11, window_bounds = array<i64: 1, 128, 128>}, {transform_indices = @transform_12, window_bounds = array<i64: 1, 1, 128>}, {transform_indices = @transform_13, window_bounds = array<i64: 1, 2, 128>}, {transform_indices = @transform_14, window_bounds = array<i64: 1, 128, 256>}, {transform_indices = @transform_15, window_bounds = array<i64: 1, 1, 256>}, {transform_indices = @transform_16, window_bounds = array<i64: 1, 256, 128>}, {transform_indices = @transform_17, window_bounds = array<i64: 1, 1, 128>}, {transform_indices = @transform_18, window_bounds = array<i64: 1, 2, 128>}, {pipeline_mode = #tpu.pipeline_mode<synchronous>, transform_indices = @transform_19, window_bounds = array<i64: 128, 128>}, {pipeline_mode = #tpu.pipeline_mode<synchronous>, transform_indices = @transform_20, window_bounds = array<i64: 1, 128>}, {pipeline_mode = #tpu.pipeline_mode<synchronous>, transform_indices = @transform_21, window_bounds = array<i64: 2, 128>}]} {
    %c0_i32 = arith.constant 0 : i32
    %0 = arith.cmpi eq, %arg0, %c0_i32 : i32
    %1 = arith.extui %0 : i1 to i32
    %c0_i32_0 = arith.constant 0 : i32
    %2 = arith.cmpi ne, %1, %c0_i32_0 : i32
    scf.if %2 {
      %c0_65 = arith.constant 0 : index
      %c0_66 = arith.constant 0 : index
      %147 = vector.load %arg1[%c0_65, %c0_66] : memref<16x1xi32, #tpu.memory_space<vmem>>, vector<16x1xi32>
      %c0_67 = arith.constant 0 : index
      %c0_68 = arith.constant 0 : index
      %148 = vector.load %arg2[%c0_67, %c0_68] : memref<16x1xi32, #tpu.memory_space<vmem>>, vector<16x1xi32>
      %149 = arith.sitofp %148 : vector<16x1xi32> to vector<16x1xf32>
      %150 = tpu.iota {dimensions = array<i32: 1>} : vector<16x128xi32>
      %151 = vector.broadcast %147 : vector<16x1xi32> to vector<16x128xi32>
      %152 = arith.cmpi eq, %151, %150 : vector<16x128xi32>
      %cst_69 = arith.constant 1.000000e+00 : f32
      %cst_70 = arith.constant 0.000000e+00 : f32
      %153 = vector.broadcast %cst_69 : f32 to vector<16x128xf32>
      %154 = vector.broadcast %cst_70 : f32 to vector<16x128xf32>
      %155 = arith.select %152, %153, %154 : vector<16x128xi1>, vector<16x128xf32>
      %c0_71 = arith.constant 0 : index
      %c0_72 = arith.constant 0 : index
      %156 = vector.load %arg4[%c0_71, %c0_72] : memref<128x128xf32, #tpu.memory_space<vmem>>, vector<128x128xf32>
      %cst_73 = arith.constant dense<0.000000e+00> : vector<16x128xf32>
      %157 = tpu.matmul %155, %156, %cst_73 {dimension_numbers = #tpu.dot_dimension_numbers<[1], [0], [0], [1], [0, 0, 1, 1], [], []>} : vector<16x128xf32>, vector<128x128xf32>, vector<16x128xf32> -> vector<16x128xf32>
      %c0_74 = arith.constant 0 : index
      %c0_75 = arith.constant 0 : index
      %158 = vector.load %arg6[%c0_74, %c0_75] : memref<2x128xf32, #tpu.memory_space<vmem>>, vector<2x128xf32>
      %159 = vector.extract_strided_slice %158 {offsets = [0, 0], sizes = [1, 128], strides = [1, 1]} : vector<2x128xf32> to vector<1x128xf32>
      %cst_76 = arith.constant 1.000000e+00 : f32
      %160 = vector.broadcast %cst_76 : f32 to vector<16x1xf32>
      %161 = arith.subf %160, %149 : vector<16x1xf32>
      %162 = vector.broadcast %159 : vector<1x128xf32> to vector<16x128xf32>
      %163 = vector.broadcast %161 : vector<16x1xf32> to vector<16x128xf32>
      %164 = arith.mulf %162, %163 : vector<16x128xf32>
      %165 = vector.extract_strided_slice %158 {offsets = [1, 0], sizes = [1, 128], strides = [1, 1]} : vector<2x128xf32> to vector<1x128xf32>
      %166 = vector.broadcast %165 : vector<1x128xf32> to vector<16x128xf32>
      %167 = vector.broadcast %149 : vector<16x1xf32> to vector<16x128xf32>
      %168 = arith.mulf %166, %167 : vector<16x128xf32>
      %169 = arith.addf %164, %168 : vector<16x128xf32>
      %c0_77 = arith.constant 0 : index
      %c0_78 = arith.constant 0 : index
      %170 = vector.load %arg5[%c0_77, %c0_78] : memref<16x128xf32, #tpu.memory_space<vmem>>, vector<16x128xf32>
      %171 = arith.addf %157, %170 : vector<16x128xf32>
      %172 = arith.addf %171, %169 : vector<16x128xf32>
      %c0_79 = arith.constant 0 : index
      %c0_80 = arith.constant 0 : index
      %173 = vector.load %arg7[%c0_79, %c0_80] : memref<2x128xf32, #tpu.memory_space<vmem>>, vector<2x128xf32>
      %174 = vector.extract_strided_slice %173 {offsets = [0, 0], sizes = [1, 128], strides = [1, 1]} : vector<2x128xf32> to vector<1x128xf32>
      %175 = vector.extract_strided_slice %173 {offsets = [1, 0], sizes = [1, 128], strides = [1, 1]} : vector<2x128xf32> to vector<1x128xf32>
      %cst_81 = arith.constant dense<0.000000e+00> : vector<16xf32>
      %176 = vector.multi_reduction <add>, %172, %cst_81 [1] : vector<16x128xf32> to vector<16xf32>
      %177 = vector.shape_cast %176 : vector<16xf32> to vector<16x1xf32>
      %cst_82 = arith.constant 1.280000e+02 : f32
      %178 = vector.broadcast %cst_82 : f32 to vector<16x1xf32>
      %179 = arith.divf %177, %178 : vector<16x1xf32>
      %180 = vector.broadcast %179 : vector<16x1xf32> to vector<16x128xf32>
      %181 = arith.subf %172, %180 : vector<16x128xf32>
      %182 = vector.broadcast %179 : vector<16x1xf32> to vector<16x128xf32>
      %183 = arith.subf %172, %182 : vector<16x128xf32>
      %184 = arith.mulf %181, %183 : vector<16x128xf32>
      %cst_83 = arith.constant dense<0.000000e+00> : vector<16xf32>
      %185 = vector.multi_reduction <add>, %184, %cst_83 [1] : vector<16x128xf32> to vector<16xf32>
      %186 = vector.shape_cast %185 : vector<16xf32> to vector<16x1xf32>
      %cst_84 = arith.constant 1.280000e+02 : f32
      %187 = vector.broadcast %cst_84 : f32 to vector<16x1xf32>
      %188 = arith.divf %186, %187 : vector<16x1xf32>
      %189 = vector.broadcast %179 : vector<16x1xf32> to vector<16x128xf32>
      %190 = arith.subf %172, %189 : vector<16x128xf32>
      %cst_85 = arith.constant 9.99999996E-13 : f32
      %191 = vector.broadcast %cst_85 : f32 to vector<16x1xf32>
      %192 = arith.addf %188, %191 : vector<16x1xf32>
      %193 = math.rsqrt %192 : vector<16x1xf32>
      %194 = vector.broadcast %193 : vector<16x1xf32> to vector<16x128xf32>
      %195 = arith.mulf %190, %194 : vector<16x128xf32>
      %196 = vector.broadcast %174 : vector<1x128xf32> to vector<16x128xf32>
      %197 = arith.mulf %195, %196 : vector<16x128xf32>
      %198 = vector.broadcast %175 : vector<1x128xf32> to vector<16x128xf32>
      %199 = arith.addf %197, %198 : vector<16x128xf32>
      %c0_86 = arith.constant 0 : index
      %c0_87 = arith.constant 0 : index
      %200 = vector.load %arg23[%c0_86, %c0_87] : memref<16x128xf32, #tpu.memory_space<vmem>>, vector<16x128xf32>
      tpu.vector_store %arg23[%c0_86, %c0_87], %199 {strides = array<i32>} : memref<16x128xf32, #tpu.memory_space<vmem>>, vector<16x128xf32>,
    } else {
    }
    %c0 = arith.constant 0 : index
    %c0_1 = arith.constant 0 : index
    %3 = vector.load %arg8[%c0, %c0_1] : memref<64x16xf32, #tpu.memory_space<vmem>>, vector<64x16xf32>
    %c0_2 = arith.constant 0 : index
    %c0_3 = arith.constant 0 : index
    %4 = vector.load %arg3[%c0_2, %c0_3] : memref<1x16xf32, #tpu.memory_space<vmem>>, vector<1x16xf32>
    %cst = arith.constant 1.000000e+00 : f32
    %5 = vector.broadcast %cst : f32 to vector<1x16xf32>
    %6 = arith.subf %5, %4 : vector<1x16xf32>
    %cst_4 = arith.constant -1.000000e+09 : f32
    %7 = vector.broadcast %cst_4 : f32 to vector<1x16xf32>
    %8 = arith.mulf %6, %7 : vector<1x16xf32>
    %9 = vector.broadcast %8 : vector<1x16xf32> to vector<64x16xf32>
    %10 = arith.addf %3, %9 : vector<64x16xf32>
    %c0_5 = arith.constant 0 : index
    %c0_6 = arith.constant 0 : index
    %11 = vector.load %arg9[%c0_5, %c0_6] : memref<64x128xf32, #tpu.memory_space<vmem>>, vector<64x128xf32>
    %c0_7 = arith.constant 0 : index
    %c0_8 = arith.constant 0 : index
    %12 = vector.load %arg23[%c0_7, %c0_8] : memref<16x128xf32, #tpu.memory_space<vmem>>, vector<16x128xf32>
    %13 = arith.truncf %12 : vector<16x128xf32> to vector<16x128xbf16>
    %c0_9 = arith.constant 0 : index
    %c0_10 = arith.constant 0 : index
    %c0_11 = arith.constant 0 : index
    %14 = vector.load %arg10[%c0_9, %c0_10, %c0_11] : memref<1x128x384xbf16, #tpu.memory_space<vmem>>, vector<1x128x384xbf16>
    %15 = vector.shape_cast %14 : vector<1x128x384xbf16> to vector<128x384xbf16>
    %cst_12 = arith.constant dense<0.000000e+00> : vector<16x384xf32>
    %16 = tpu.matmul %13, %15, %cst_12 {dimension_numbers = #tpu.dot_dimension_numbers<[1], [0], [0], [1], [0, 0, 1, 1], [], []>} : vector<16x128xbf16>, vector<128x384xbf16>, vector<16x384xf32> -> vector<16x384xf32>
    %c0_13 = arith.constant 0 : index
    %c0_14 = arith.constant 0 : index
    %c0_15 = arith.constant 0 : index
    %17 = vector.load %arg11[%c0_13, %c0_14, %c0_15] : memref<1x1x384xf32, #tpu.memory_space<vmem>>, vector<1x1x384xf32>
    %18 = vector.shape_cast %17 : vector<1x1x384xf32> to vector<1x384xf32>
    %19 = vector.broadcast %18 : vector<1x384xf32> to vector<16x384xf32>
    %20 = arith.addf %16, %19 : vector<16x384xf32>
    %21 = vector.extract_strided_slice %20 {offsets = [0, 0], sizes = [16, 128], strides = [1, 1]} : vector<16x384xf32> to vector<16x128xf32>
    %22 = vector.extract_strided_slice %20 {offsets = [0, 128], sizes = [16, 128], strides = [1, 1]} : vector<16x384xf32> to vector<16x128xf32>
    %23 = vector.extract_strided_slice %20 {offsets = [0, 256], sizes = [16, 128], strides = [1, 1]} : vector<16x384xf32> to vector<16x128xf32>
    %24 = tpu.concatenate %21, %21, %21, %21 in 0 : vector<16x128xf32>, vector<16x128xf32>, vector<16x128xf32>, vector<16x128xf32> -> vector<64x128xf32>
    %25 = arith.mulf %24, %11 : vector<64x128xf32>
    %cst_16 = arith.constant dense<0.000000e+00> : vector<64x16xf32>
    %26 = tpu.matmul %25, %22, %cst_16 {dimension_numbers = #tpu.dot_dimension_numbers<[1], [1], [0], [0], [0, 0, 1, 0], [], []>} : vector<64x128xf32>, vector<16x128xf32>, vector<64x16xf32> -> vector<64x16xf32>
    %cst_17 = arith.constant 0.176776692 : f32
    %27 = vector.broadcast %cst_17 : f32 to vector<64x16xf32>
    %28 = arith.mulf %26, %27 : vector<64x16xf32>
    %29 = arith.addf %28, %10 : vector<64x16xf32>
    %cst_18 = arith.constant dense<0xFF800000> : vector<64xf32>
    %30 = vector.multi_reduction <maximumf>, %29, %cst_18 [1] : vector<64x16xf32> to vector<64xf32>
    %31 = vector.shape_cast %30 : vector<64xf32> to vector<64x1xf32>
    %32 = vector.broadcast %31 : vector<64x1xf32> to vector<64x16xf32>
    %33 = arith.subf %29, %32 : vector<64x16xf32>
    %34 = math.exp %33 : vector<64x16xf32>
    %cst_19 = arith.constant dense<0.000000e+00> : vector<64xf32>
    %35 = vector.multi_reduction <add>, %34, %cst_19 [1] : vector<64x16xf32> to vector<64xf32>
    %36 = vector.shape_cast %35 : vector<64xf32> to vector<64x1xf32>
    %37 = vector.broadcast %36 : vector<64x1xf32> to vector<64x16xf32>
    %38 = arith.divf %34, %37 : vector<64x16xf32>
    %cst_20 = arith.constant dense<0.000000e+00> : vector<64x128xf32>
    %39 = tpu.matmul %38, %23, %cst_20 {dimension_numbers = #tpu.dot_dimension_numbers<[1], [0], [0], [1], [0, 0, 1, 1], [], []>} : vector<64x16xf32>, vector<16x128xf32>, vector<64x128xf32> -> vector<64x128xf32>
    %40 = arith.mulf %39, %11 : vector<64x128xf32>
    %41 = vector.extract_strided_slice %40 {offsets = [0, 0], sizes = [16, 128], strides = [1, 1]} : vector<64x128xf32> to vector<16x128xf32>
    %42 = vector.extract_strided_slice %40 {offsets = [16, 0], sizes = [16, 128], strides = [1, 1]} : vector<64x128xf32> to vector<16x128xf32>
    %43 = arith.addf %41, %42 : vector<16x128xf32>
    %44 = vector.extract_strided_slice %40 {offsets = [32, 0], sizes = [16, 128], strides = [1, 1]} : vector<64x128xf32> to vector<16x128xf32>
    %45 = arith.addf %43, %44 : vector<16x128xf32>
    %46 = vector.extract_strided_slice %40 {offsets = [48, 0], sizes = [16, 128], strides = [1, 1]} : vector<64x128xf32> to vector<16x128xf32>
    %47 = arith.addf %45, %46 : vector<16x128xf32>
    %48 = arith.truncf %47 : vector<16x128xf32> to vector<16x128xbf16>
    %c0_21 = arith.constant 0 : index
    %c0_22 = arith.constant 0 : index
    %c0_23 = arith.constant 0 : index
    %49 = vector.load %arg12[%c0_21, %c0_22, %c0_23] : memref<1x128x128xbf16, #tpu.memory_space<vmem>>, vector<1x128x128xbf16>
    %50 = vector.shape_cast %49 : vector<1x128x128xbf16> to vector<128x128xbf16>
    %cst_24 = arith.constant dense<0.000000e+00> : vector<16x128xf32>
    %51 = tpu.matmul %48, %50, %cst_24 {dimension_numbers = #tpu.dot_dimension_numbers<[1], [0], [0], [1], [0, 0, 1, 1], [], []>} : vector<16x128xbf16>, vector<128x128xbf16>, vector<16x128xf32> -> vector<16x128xf32>
    %c0_25 = arith.constant 0 : index
    %c0_26 = arith.constant 0 : index
    %c0_27 = arith.constant 0 : index
    %52 = vector.load %arg13[%c0_25, %c0_26, %c0_27] : memref<1x1x128xf32, #tpu.memory_space<vmem>>, vector<1x1x128xf32>
    %53 = vector.shape_cast %52 : vector<1x1x128xf32> to vector<1x128xf32>
    %54 = vector.broadcast %53 : vector<1x128xf32> to vector<16x128xf32>
    %55 = arith.addf %51, %54 : vector<16x128xf32>
    %56 = arith.addf %12, %55 : vector<16x128xf32>
    %c0_28 = arith.constant 0 : index
    %c0_29 = arith.constant 0 : index
    %c0_30 = arith.constant 0 : index
    %57 = vector.load %arg14[%c0_28, %c0_29, %c0_30] : memref<1x2x128xf32, #tpu.memory_space<vmem>>, vector<1x2x128xf32>
    %58 = vector.shape_cast %57 : vector<1x2x128xf32> to vector<2x128xf32>
    %59 = vector.extract_strided_slice %58 {offsets = [0, 0], sizes = [1, 128], strides = [1, 1]} : vector<2x128xf32> to vector<1x128xf32>
    %60 = vector.extract_strided_slice %58 {offsets = [1, 0], sizes = [1, 128], strides = [1, 1]} : vector<2x128xf32> to vector<1x128xf32>
    %cst_31 = arith.constant dense<0.000000e+00> : vector<16xf32>
    %61 = vector.multi_reduction <add>, %56, %cst_31 [1] : vector<16x128xf32> to vector<16xf32>
    %62 = vector.shape_cast %61 : vector<16xf32> to vector<16x1xf32>
    %cst_32 = arith.constant 1.280000e+02 : f32
    %63 = vector.broadcast %cst_32 : f32 to vector<16x1xf32>
    %64 = arith.divf %62, %63 : vector<16x1xf32>
    %65 = vector.broadcast %64 : vector<16x1xf32> to vector<16x128xf32>
    %66 = arith.subf %56, %65 : vector<16x128xf32>
    %67 = vector.broadcast %64 : vector<16x1xf32> to vector<16x128xf32>
    %68 = arith.subf %56, %67 : vector<16x128xf32>
    %69 = arith.mulf %66, %68 : vector<16x128xf32>
    %cst_33 = arith.constant dense<0.000000e+00> : vector<16xf32>
    %70 = vector.multi_reduction <add>, %69, %cst_33 [1] : vector<16x128xf32> to vector<16xf32>
    %71 = vector.shape_cast %70 : vector<16xf32> to vector<16x1xf32>
    %cst_34 = arith.constant 1.280000e+02 : f32
    %72 = vector.broadcast %cst_34 : f32 to vector<16x1xf32>
    %73 = arith.divf %71, %72 : vector<16x1xf32>
    %74 = vector.broadcast %64 : vector<16x1xf32> to vector<16x128xf32>
    %75 = arith.subf %56, %74 : vector<16x128xf32>
    %cst_35 = arith.constant 9.99999996E-13 : f32
    %76 = vector.broadcast %cst_35 : f32 to vector<16x1xf32>
    %77 = arith.addf %73, %76 : vector<16x1xf32>
    %78 = math.rsqrt %77 : vector<16x1xf32>
    %79 = vector.broadcast %78 : vector<16x1xf32> to vector<16x128xf32>
    %80 = arith.mulf %75, %79 : vector<16x128xf32>
    %81 = vector.broadcast %59 : vector<1x128xf32> to vector<16x128xf32>
    %82 = arith.mulf %80, %81 : vector<16x128xf32>
    %83 = vector.broadcast %60 : vector<1x128xf32> to vector<16x128xf32>
    %84 = arith.addf %82, %83 : vector<16x128xf32>
    %85 = arith.truncf %84 : vector<16x128xf32> to vector<16x128xbf16>
    %c0_36 = arith.constant 0 : index
    %c0_37 = arith.constant 0 : index
    %c0_38 = arith.constant 0 : index
    %86 = vector.load %arg15[%c0_36, %c0_37, %c0_38] : memref<1x128x256xbf16, #tpu.memory_space<vmem>>, vector<1x128x256xbf16>
    %87 = vector.shape_cast %86 : vector<1x128x256xbf16> to vector<128x256xbf16>
    %cst_39 = arith.constant dense<0.000000e+00> : vector<16x256xf32>
    %88 = tpu.matmul %85, %87, %cst_39 {dimension_numbers = #tpu.dot_dimension_numbers<[1], [0], [0], [1], [0, 0, 1, 1], [], []>} : vector<16x128xbf16>, vector<128x256xbf16>, vector<16x256xf32> -> vector<16x256xf32>
    %c0_40 = arith.constant 0 : index
    %c0_41 = arith.constant 0 : index
    %c0_42 = arith.constant 0 : index
    %89 = vector.load %arg16[%c0_40, %c0_41, %c0_42] : memref<1x1x256xf32, #tpu.memory_space<vmem>>, vector<1x1x256xf32>
    %90 = vector.shape_cast %89 : vector<1x1x256xf32> to vector<1x256xf32>
    %91 = vector.broadcast %90 : vector<1x256xf32> to vector<16x256xf32>
    %92 = arith.addf %88, %91 : vector<16x256xf32>
    %cst_43 = arith.constant 5.000000e-01 : f32
    %93 = vector.broadcast %cst_43 : f32 to vector<16x256xf32>
    %94 = arith.mulf %93, %92 : vector<16x256xf32>
    %cst_44 = arith.constant 4.471500e-02 : f32
    %95 = vector.broadcast %cst_44 : f32 to vector<16x256xf32>
    %96 = arith.mulf %95, %92 : vector<16x256xf32>
    %97 = arith.mulf %96, %92 : vector<16x256xf32>
    %98 = arith.mulf %97, %92 : vector<16x256xf32>
    %99 = arith.addf %92, %98 : vector<16x256xf32>
    %cst_45 = arith.constant 0.797884583 : f32
    %100 = vector.broadcast %cst_45 : f32 to vector<16x256xf32>
    %101 = arith.mulf %100, %99 : vector<16x256xf32>
    %102 = math.tanh %101 : vector<16x256xf32>
    %cst_46 = arith.constant 1.000000e+00 : f32
    %103 = vector.broadcast %cst_46 : f32 to vector<16x256xf32>
    %104 = arith.addf %103, %102 : vector<16x256xf32>
    %105 = arith.mulf %94, %104 : vector<16x256xf32>
    %106 = arith.truncf %105 : vector<16x256xf32> to vector<16x256xbf16>
    %c0_47 = arith.constant 0 : index
    %c0_48 = arith.constant 0 : index
    %c0_49 = arith.constant 0 : index
    %107 = vector.load %arg17[%c0_47, %c0_48, %c0_49] : memref<1x256x128xbf16, #tpu.memory_space<vmem>>, vector<1x256x128xbf16>
    %108 = vector.shape_cast %107 : vector<1x256x128xbf16> to vector<256x128xbf16>
    %cst_50 = arith.constant dense<0.000000e+00> : vector<16x128xf32>
    %109 = tpu.matmul %106, %108, %cst_50 {dimension_numbers = #tpu.dot_dimension_numbers<[1], [0], [0], [1], [0, 0, 1, 1], [], []>} : vector<16x256xbf16>, vector<256x128xbf16>, vector<16x128xf32> -> vector<16x128xf32>
    %c0_51 = arith.constant 0 : index
    %c0_52 = arith.constant 0 : index
    %c0_53 = arith.constant 0 : index
    %110 = vector.load %arg18[%c0_51, %c0_52, %c0_53] : memref<1x1x128xf32, #tpu.memory_space<vmem>>, vector<1x1x128xf32>
    %111 = vector.shape_cast %110 : vector<1x1x128xf32> to vector<1x128xf32>
    %112 = vector.broadcast %111 : vector<1x128xf32> to vector<16x128xf32>
    %113 = arith.addf %109, %112 : vector<16x128xf32>
    %114 = arith.addf %84, %113 : vector<16x128xf32>
    %c0_54 = arith.constant 0 : index
    %c0_55 = arith.constant 0 : index
    %c0_56 = arith.constant 0 : index
    %115 = vector.load %arg19[%c0_54, %c0_55, %c0_56] : memref<1x2x128xf32, #tpu.memory_space<vmem>>, vector<1x2x128xf32>
    %116 = vector.shape_cast %115 : vector<1x2x128xf32> to vector<2x128xf32>
    %117 = vector.extract_strided_slice %116 {offsets = [0, 0], sizes = [1, 128], strides = [1, 1]} : vector<2x128xf32> to vector<1x128xf32>
    %118 = vector.extract_strided_slice %116 {offsets = [1, 0], sizes = [1, 128], strides = [1, 1]} : vector<2x128xf32> to vector<1x128xf32>
    %cst_57 = arith.constant dense<0.000000e+00> : vector<16xf32>
    %119 = vector.multi_reduction <add>, %114, %cst_57 [1] : vector<16x128xf32> to vector<16xf32>
    %120 = vector.shape_cast %119 : vector<16xf32> to vector<16x1xf32>
    %cst_58 = arith.constant 1.280000e+02 : f32
    %121 = vector.broadcast %cst_58 : f32 to vector<16x1xf32>
    %122 = arith.divf %120, %121 : vector<16x1xf32>
    %123 = vector.broadcast %122 : vector<16x1xf32> to vector<16x128xf32>
    %124 = arith.subf %114, %123 : vector<16x128xf32>
    %125 = vector.broadcast %122 : vector<16x1xf32> to vector<16x128xf32>
    %126 = arith.subf %114, %125 : vector<16x128xf32>
    %127 = arith.mulf %124, %126 : vector<16x128xf32>
    %cst_59 = arith.constant dense<0.000000e+00> : vector<16xf32>
    %128 = vector.multi_reduction <add>, %127, %cst_59 [1] : vector<16x128xf32> to vector<16xf32>
    %129 = vector.shape_cast %128 : vector<16xf32> to vector<16x1xf32>
    %cst_60 = arith.constant 1.280000e+02 : f32
    %130 = vector.broadcast %cst_60 : f32 to vector<16x1xf32>
    %131 = arith.divf %129, %130 : vector<16x1xf32>
    %132 = vector.broadcast %122 : vector<16x1xf32> to vector<16x128xf32>
    %133 = arith.subf %114, %132 : vector<16x128xf32>
    %cst_61 = arith.constant 9.99999996E-13 : f32
    %134 = vector.broadcast %cst_61 : f32 to vector<16x1xf32>
    %135 = arith.addf %131, %134 : vector<16x1xf32>
    %136 = math.rsqrt %135 : vector<16x1xf32>
    %137 = vector.broadcast %136 : vector<16x1xf32> to vector<16x128xf32>
    %138 = arith.mulf %133, %137 : vector<16x128xf32>
    %139 = vector.broadcast %117 : vector<1x128xf32> to vector<16x128xf32>
    %140 = arith.mulf %138, %139 : vector<16x128xf32>
    %141 = vector.broadcast %118 : vector<1x128xf32> to vector<16x128xf32>
    %142 = arith.addf %140, %141 : vector<16x128xf32>
    %c0_62 = arith.constant 0 : index
    %c0_63 = arith.constant 0 : index
    %143 = vector.load %arg23[%c0_62, %c0_63] : memref<16x128xf32, #tpu.memory_space<vmem>>, vector<16x128xf32>
    tpu.vector_store %arg23[%c0_62, %c0_63], %142 {strides = array<i32>} : memref<16x128xf32, #tpu.memory_space<vmem>>, vector<16x128xf32>,
    %c1_i32 = arith.constant 1 : i32
    %144 = arith.cmpi eq, %arg0, %c1_i32 : i32
    %145 = arith.extui %144 : i1 to i32
    %c0_i32_64 = arith.constant 0 : i32
    %146 = arith.cmpi ne, %145, %c0_i32_64 : i32
    scf.if %146 {
      %147 = vector.extract_strided_slice %142 {offsets = [0, 0], sizes = [1, 128], strides = [1, 1]} : vector<16x128xf32> to vector<1x128xf32>
      %148 = vector.extract_strided_slice %142 {offsets = [8, 0], sizes = [1, 128], strides = [1, 1]} : vector<16x128xf32> to vector<1x128xf32>
      %149 = tpu.concatenate %147, %148 in 0 : vector<1x128xf32>, vector<1x128xf32> -> vector<2x128xf32>
      %150 = arith.truncf %149 : vector<2x128xf32> to vector<2x128xbf16>
      %c0_65 = arith.constant 0 : index
      %c0_66 = arith.constant 0 : index
      %151 = vector.load %arg20[%c0_65, %c0_66] : memref<128x128xbf16, #tpu.memory_space<vmem>>, vector<128x128xbf16>
      %cst_67 = arith.constant dense<0.000000e+00> : vector<2x128xf32>
      %152 = tpu.matmul %150, %151, %cst_67 {dimension_numbers = #tpu.dot_dimension_numbers<[1], [0], [0], [1], [0, 0, 1, 1], [], []>} : vector<2x128xbf16>, vector<128x128xbf16>, vector<2x128xf32> -> vector<2x128xf32>
      %c0_68 = arith.constant 0 : index
      %c0_69 = arith.constant 0 : index
      %153 = vector.load %arg21[%c0_68, %c0_69] : memref<1x128xf32, #tpu.memory_space<vmem>>, vector<1x128xf32>
      %154 = vector.broadcast %153 : vector<1x128xf32> to vector<2x128xf32>
      %155 = arith.addf %152, %154 : vector<2x128xf32>
      %156 = math.tanh %155 : vector<2x128xf32>
      %c0_70 = arith.constant 0 : index
      %c0_71 = arith.constant 0 : index
      %157 = vector.load %arg22[%c0_70, %c0_71] : memref<2x128xf32, #tpu.memory_space<vmem>>, vector<2x128xf32>
      tpu.vector_store %arg22[%c0_70, %c0_71], %156 {strides = array<i32>} : memref<2x128xf32, #tpu.memory_space<vmem>>, vector<2x128xf32>,
    } else {
    }
    return
  }
  func.func @transform_0(%arg0: i32) -> (i32, i32) {
    %c0_i32 = arith.constant 0 : i32
    %c0_i32_0 = arith.constant 0 : i32
    %c0_i32_1 = arith.constant 0 : i32
    return %c0_i32, %c0_i32_0 : i32, i32
  }
  func.func @transform_1(%arg0: i32) -> (i32, i32) {
    %c0_i32 = arith.constant 0 : i32
    %c0_i32_0 = arith.constant 0 : i32
    %c0_i32_1 = arith.constant 0 : i32
    return %c0_i32, %c0_i32_0 : i32, i32
  }
  func.func @transform_2(%arg0: i32) -> (i32, i32) {
    %c0_i32 = arith.constant 0 : i32
    %c0_i32_0 = arith.constant 0 : i32
    %c0_i32_1 = arith.constant 0 : i32
    return %c0_i32, %c0_i32_0 : i32, i32
  }
  func.func @transform_3(%arg0: i32) -> (i32, i32) {
    %c0_i32 = arith.constant 0 : i32
    %c0_i32_0 = arith.constant 0 : i32
    %c0_i32_1 = arith.constant 0 : i32
    return %c0_i32, %c0_i32_0 : i32, i32
  }
  func.func @transform_4(%arg0: i32) -> (i32, i32) {
    %c0_i32 = arith.constant 0 : i32
    %c0_i32_0 = arith.constant 0 : i32
    %c0_i32_1 = arith.constant 0 : i32
    return %c0_i32, %c0_i32_0 : i32, i32
  }
  func.func @transform_5(%arg0: i32) -> (i32, i32) {
    %c0_i32 = arith.constant 0 : i32
    %c0_i32_0 = arith.constant 0 : i32
    %c0_i32_1 = arith.constant 0 : i32
    return %c0_i32, %c0_i32_0 : i32, i32
  }
  func.func @transform_6(%arg0: i32) -> (i32, i32) {
    %c0_i32 = arith.constant 0 : i32
    %c0_i32_0 = arith.constant 0 : i32
    %c0_i32_1 = arith.constant 0 : i32
    return %c0_i32, %c0_i32_0 : i32, i32
  }
  func.func @transform_7(%arg0: i32) -> (i32, i32) {
    %c0_i32 = arith.constant 0 : i32
    %c0_i32_0 = arith.constant 0 : i32
    %c0_i32_1 = arith.constant 0 : i32
    return %c0_i32, %c0_i32_0 : i32, i32
  }
  func.func @transform_8(%arg0: i32) -> (i32, i32) {
    %c0_i32 = arith.constant 0 : i32
    %c0_i32_0 = arith.constant 0 : i32
    %c0_i32_1 = arith.constant 0 : i32
    return %c0_i32, %c0_i32_0 : i32, i32
  }
  func.func @transform_9(%arg0: i32) -> (i32, i32, i32) {
    %c0_i32 = arith.constant 0 : i32
    %c0_i32_0 = arith.constant 0 : i32
    %c0_i32_1 = arith.constant 0 : i32
    return %arg0, %c0_i32, %c0_i32_0 : i32, i32, i32
  }
  func.func @transform_10(%arg0: i32) -> (i32, i32, i32) {
    %c0_i32 = arith.constant 0 : i32
    %c0_i32_0 = arith.constant 0 : i32
    %c0_i32_1 = arith.constant 0 : i32
    return %arg0, %c0_i32, %c0_i32_0 : i32, i32, i32
  }
  func.func @transform_11(%arg0: i32) -> (i32, i32, i32) {
    %c0_i32 = arith.constant 0 : i32
    %c0_i32_0 = arith.constant 0 : i32
    %c0_i32_1 = arith.constant 0 : i32
    return %arg0, %c0_i32, %c0_i32_0 : i32, i32, i32
  }
  func.func @transform_12(%arg0: i32) -> (i32, i32, i32) {
    %c0_i32 = arith.constant 0 : i32
    %c0_i32_0 = arith.constant 0 : i32
    %c0_i32_1 = arith.constant 0 : i32
    return %arg0, %c0_i32, %c0_i32_0 : i32, i32, i32
  }
  func.func @transform_13(%arg0: i32) -> (i32, i32, i32) {
    %c0_i32 = arith.constant 0 : i32
    %c0_i32_0 = arith.constant 0 : i32
    %c0_i32_1 = arith.constant 0 : i32
    return %arg0, %c0_i32, %c0_i32_0 : i32, i32, i32
  }
  func.func @transform_14(%arg0: i32) -> (i32, i32, i32) {
    %c0_i32 = arith.constant 0 : i32
    %c0_i32_0 = arith.constant 0 : i32
    %c0_i32_1 = arith.constant 0 : i32
    return %arg0, %c0_i32, %c0_i32_0 : i32, i32, i32
  }
  func.func @transform_15(%arg0: i32) -> (i32, i32, i32) {
    %c0_i32 = arith.constant 0 : i32
    %c0_i32_0 = arith.constant 0 : i32
    %c0_i32_1 = arith.constant 0 : i32
    return %arg0, %c0_i32, %c0_i32_0 : i32, i32, i32
  }
  func.func @transform_16(%arg0: i32) -> (i32, i32, i32) {
    %c0_i32 = arith.constant 0 : i32
    %c0_i32_0 = arith.constant 0 : i32
    %c0_i32_1 = arith.constant 0 : i32
    return %arg0, %c0_i32, %c0_i32_0 : i32, i32, i32
  }
  func.func @transform_17(%arg0: i32) -> (i32, i32, i32) {
    %c0_i32 = arith.constant 0 : i32
    %c0_i32_0 = arith.constant 0 : i32
    %c0_i32_1 = arith.constant 0 : i32
    return %arg0, %c0_i32, %c0_i32_0 : i32, i32, i32
  }
  func.func @transform_18(%arg0: i32) -> (i32, i32, i32) {
    %c0_i32 = arith.constant 0 : i32
    %c0_i32_0 = arith.constant 0 : i32
    %c0_i32_1 = arith.constant 0 : i32
    return %arg0, %c0_i32, %c0_i32_0 : i32, i32, i32
  }
  func.func @transform_19(%arg0: i32) -> (i32, i32) {
    %c0_i32 = arith.constant 0 : i32
    %c0_i32_0 = arith.constant 0 : i32
    %c0_i32_1 = arith.constant 0 : i32
    return %c0_i32, %c0_i32_0 : i32, i32
  }
  func.func @transform_20(%arg0: i32) -> (i32, i32) {
    %c0_i32 = arith.constant 0 : i32
    %c0_i32_0 = arith.constant 0 : i32
    %c0_i32_1 = arith.constant 0 : i32
    return %c0_i32, %c0_i32_0 : i32, i32
  }
  func.func @transform_21(%arg0: i32) -> (i32, i32) {
    %c0_i32 = arith.constant 0 : i32
    %c0_i32_0 = arith.constant 0 : i32
    %c0_i32_1 = arith.constant 0 : i32
    return %c0_i32, %c0_i32_0 : i32, i32
  }
}

</mosaic_0001>

<llo_original>
// kernel: textnet_forward.1
$region0: #{textnet_forward.1}
  #allocation0 [shape = 'u32[]', space=smem, size = 0x4, offset = 0x4, fixed_abs, tag = 'smem constant byte address 0x4 - core index']
  #allocation1 [shape = 'u32[72,128]{1,0:T(1,128)}', space=vmem, size = 0x9000, scoped, tag = 'internal scratch']
  #allocation2 [shape = 'f32[16,128]{1,0:T(8,128)}', space=vmem, size = 0x2000, scoped, tag = 'scratch operand']
  %s0 = inlined_call_operand.vmem [shape: s32[16,1], index: 0, kind: input, shape index: {}]
  %s1 = inlined_call_operand.vmem [shape: s32[16,1], index: 1, kind: input, shape index: {}]
  %s2 = inlined_call_operand.vmem [shape: f32[1,16], index: 2, kind: input, shape index: {}]
  %s3 = inlined_call_operand.vmem [shape: f32[128,128], index: 3, kind: input, shape index: {}]
  %s4 = inlined_call_operand.hbm [shape: f32[16,128], index: 4, kind: input, shape index: {}]
  %s5 = inlined_call_operand.hbm [shape: f32[2,128], index: 5, kind: input, shape index: {}]
  %s6 = inlined_call_operand.hbm [shape: f32[2,128], index: 6, kind: input, shape index: {}]
  %s7 = inlined_call_operand.vmem [shape: f32[64,16], index: 7, kind: input, shape index: {}]
  %s8 = inlined_call_operand.hbm [shape: f32[64,128], index: 8, kind: input, shape index: {}]
  %s9 = inlined_call_operand.hbm [shape: bf16[2,128,384], index: 9, kind: input, shape index: {}]
  %s10 = inlined_call_operand.vmem [shape: f32[2,1,384], index: 10, kind: input, shape index: {}]
  %s11 = inlined_call_operand.hbm [shape: bf16[2,128,128], index: 11, kind: input, shape index: {}]
  %s12 = inlined_call_operand.hbm [shape: f32[2,1,128], index: 12, kind: input, shape index: {}]
  %s13 = inlined_call_operand.vmem [shape: f32[2,2,128], index: 13, kind: input, shape index: {}]
  %s14 = inlined_call_operand.hbm [shape: bf16[2,128,256], index: 14, kind: input, shape index: {}]
  %s15 = inlined_call_operand.hbm [shape: f32[2,1,256], index: 15, kind: input, shape index: {}]
  %s16 = inlined_call_operand.hbm [shape: bf16[2,256,128], index: 16, kind: input, shape index: {}]
  %s17 = inlined_call_operand.hbm [shape: f32[2,1,128], index: 17, kind: input, shape index: {}]
  %s18 = inlined_call_operand.hbm [shape: f32[2,2,128], index: 18, kind: input, shape index: {}]
  %s19 = inlined_call_operand.hbm [shape: bf16[128,128], index: 19, kind: input, shape index: {}]
  %s20 = inlined_call_operand.hbm [shape: f32[1,128], index: 20, kind: input, shape index: {}]
  %s21 = inlined_call_operand.hbm [shape: f32[2,128], index: 21, kind: output, shape index: {}]
  %s22 = sld [smem:[#allocation0]]
  $region181: #{textnet_forward.1} parent=0
    _
  %s24 = ssub.s32 1, %s22
  %s25 = scalar_select 0, %s24, %s22
  $region1: #{textnet_forward.1} parent=0
    #allocation3 [shape = 'u8[8192]{0}', space=vmem, size = 0x2000, scoped, tag = 'input window, operand 4, single buffered']
    #allocation4 [shape = 's32[2]{0}', space=sflag, size = 0x8, scoped, tag = 'scoped memory for textnet_forward.1']
    #allocation5 [shape = 's32[2]{0}', space=sflag, size = 0x8, scoped, tag = 'scoped memory for textnet_forward.1']
    #allocation6 [shape = 'u8[1024]{0}', space=vmem, size = 0x400, scoped, tag = 'input window, operand 5, single buffered']
    #allocation7 [shape = 's32[1]{0}', space=sflag, size = 0x4, scoped, tag = 'scoped memory for textnet_forward.1']
    #allocation8 [shape = 'u8[1024]{0}', space=vmem, size = 0x400, scoped, tag = 'input window, operand 6, single buffered']
    #allocation9 [shape = 'u8[32768]{0}', space=vmem, size = 0x8000, scoped, tag = 'input window, operand 8, single buffered']
    #allocation10 [shape = 's32[1]{0}', space=sflag, size = 0x4, scoped, tag = 'scoped memory for textnet_forward.1']
    #allocation11 [shape = 'u8[196608]{0}', space=vmem, size = 0x30000, scoped, tag = 'input window, operand 9']
    #allocation12 [shape = 'u8[65536]{0}', space=vmem, size = 0x10000, scoped, tag = 'input window, operand 11']
    #allocation13 [shape = 'u8[1024]{0}', space=vmem, size = 0x400, scoped, tag = 'input window, operand 12']
    #allocation14 [shape = 'u8[131072]{0}', space=vmem, size = 0x20000, scoped, tag = 'input window, operand 14']
    #allocation15 [shape = 'u8[2048]{0}', space=vmem, size = 0x800, scoped, tag = 'input window, operand 15']
    #allocation16 [shape = 'u8[131072]{0}', space=vmem, size = 0x20000, scoped, tag = 'input window, operand 16']
    #allocation17 [shape = 'u8[1024]{0}', space=vmem, size = 0x400, scoped, tag = 'input window, operand 17']
    #allocation18 [shape = 'u8[2048]{0}', space=vmem, size = 0x800, scoped, tag = 'input window, operand 18']
    #allocation19 [shape = 'u8[32768]{0}', space=vmem, size = 0x8000, scoped, tag = 'input window, operand 19, single buffered']
    #allocation20 [shape = 'u8[512]{0}', space=vmem, size = 0x400, scoped, tag = 'input window, operand 20, single buffered']
    #allocation21 [shape = 'u8[1024]{0}', space=vmem, size = 0x400, scoped, tag = 'output window, operand 0, single buffered']
    %26 = vsyncpa [#allocation4], 0
    %27 = vsyncpa [#allocation7], 0
    %28 = vsyncpa [#allocation10], 0
    %29 = vsyncpa [#allocation5], 0
    loop: start=0, step=1, limit=4
    $region2: #{textnet_forward.1} parent=1 // loop_pre_header
      _
    $region3: #{textnet_forward.1} parent=1 // loop_header
      %s31 = sphi 0, %s35
      %p32 = scmp.ge.s32.totalorder %s31, 4
      %s39 = sphi 0, %s39
      %s41 = sphi 0, %s39
      %s42 = sphi 0, %s41
      %s56 = sphi 0, %s42
      %s60 = sphi 0, %s60
      %s62 = sphi 0, %s60
      %s63 = sphi 0, %s62
      %s77 = sphi 0, %s63
      %s81 = sphi 0, %s81
      %s83 = sphi 0, %s81
      %s84 = sphi 0, %s83
      %s98 = sphi 0, %s84
      %s102 = sphi 0, %s102
      %s104 = sphi 0, %s102
      %s105 = sphi 0, %s104
      %s119 = sphi 0, %s105
      %s123 = sphi 0, %s123
      %s125 = sphi 0, %s123
      %s126 = sphi 0, %s125
      %s140 = sphi 0, %s126
      %s144 = sphi 0, %s144
      %s146 = sphi 0, %s144
      %s147 = sphi 0, %s146
      %s161 = sphi 0, %s147
      %s165 = sphi 0, %s165
      %s167 = sphi 0, %s165
      %s168 = sphi 0, %s167
      %s182 = sphi 0, %s168
      %s186 = sphi 0, %s186
      %s188 = sphi 0, %s186
      %s189 = sphi 0, %s188
      %s203 = sphi 0, %s189
      %s207 = sphi 0, %s207
      %s209 = sphi 0, %s207
      %s210 = sphi 0, %s209
      %s224 = sphi 0, %s210
      %s230 = sphi 0, %s232
      %s233 = sphi 0, %s230
      %s234 = sphi 0, %s233
      %s250 = sphi 0, %s234
      %s256 = sphi 0, %s258
      %s259 = sphi 0, %s256
      %s260 = sphi 0, %s259
      %s276 = sphi 0, %s260
      %s282 = sphi 0, %s284
      %s285 = sphi 0, %s282
      %s286 = sphi 0, %s285
      %s302 = sphi 0, %s286
      %s308 = sphi 0, %s310
      %s311 = sphi 0, %s308
      %s312 = sphi 0, %s311
      %s328 = sphi 0, %s312
      %s334 = sphi 0, %s336
      %s337 = sphi 0, %s334
      %s338 = sphi 0, %s337
      %s354 = sphi 0, %s338
      %s360 = sphi 0, %s362
      %s363 = sphi 0, %s360
      %s364 = sphi 0, %s363
      %s380 = sphi 0, %s364
      %s386 = sphi 0, %s388
      %s389 = sphi 0, %s386
      %s390 = sphi 0, %s389
      %s406 = sphi 0, %s390
      %s412 = sphi 0, %s414
      %s415 = sphi 0, %s412
      %s416 = sphi 0, %s415
      %s432 = sphi 0, %s416
      %s438 = sphi 0, %s440
      %s441 = sphi 0, %s438
      %s442 = sphi 0, %s441
      %s458 = sphi 0, %s442
      %s464 = sphi 0, %s466
      %s467 = sphi 0, %s464
      %s468 = sphi 0, %s467
      %s484 = sphi 0, %s468
      %s488 = sphi 0, %s488
      %s490 = sphi 0, %s488
      %s491 = sphi 0, %s490
      %s505 = sphi 0, %s491
      %s509 = sphi 0, %s509
      %s511 = sphi 0, %s509
      %s512 = sphi 0, %s511
      %s526 = sphi 0, %s512
      %s530 = sphi 0, %s530
      %s532 = sphi 0, %s530
      %s533 = sphi 0, %s532
      %s547 = sphi 0, %s533
    $region4: #{textnet_forward.1} parent=1 // loop_header_branch
      %34 = sbr.rel (%p32) target = $region8
    $region5: #{textnet_forward.1} parent=1 // loop_body
      %s36 = ssub.s32 %s31, 1
      %s37 = ssub.s32 %s31, 2
      %s38 = sadd.s32 %s31, 1
      %s40 = sadd.s32 %s39, 1
      %p43 = scmp.eq.s32.totalorder %s31, 1
      %p44 = scmp.ne.s32.totalorder %s39, %s41
      %p45 = scmp.eq.s32.totalorder %s31, 0
      %p46 = por %p44, %p45
      %p47 = scmp.ne.s32.totalorder %s39, %s41
      %p48 = scmp.eq.s32.totalorder %s36, 1
      %p49 = por %p47, %p48
      %p50 = scmp.ne.s32.totalorder %s41, %s42
      %p51 = scmp.eq.s32.totalorder %s36, 0
      %p52 = por %p50, %p51
      %p53 = scmp.ne.s32.totalorder %s41, %s42
      %p54 = scmp.eq.s32.totalorder %s37, 1
      %p55 = por %p53, %p54
      %p57 = scmp.ne.s32.totalorder %s42, %s56
      %p58 = scmp.eq.s32.totalorder %s37, 0
      %p59 = por %p57, %p58
      %s61 = sadd.s32 %s60, 1
      %p64 = scmp.eq.s32.totalorder %s31, 1
      %p65 = scmp.ne.s32.totalorder %s60, %s62
      %p66 = scmp.eq.s32.totalorder %s31, 0
      %p67 = por %p65, %p66
      %p68 = scmp.ne.s32.totalorder %s60, %s62
      %p69 = scmp.eq.s32.totalorder %s36, 1
      %p70 = por %p68, %p69
      %p71 = scmp.ne.s32.totalorder %s62, %s63
      %p72 = scmp.eq.s32.totalorder %s36, 0
      %p73 = por %p71, %p72
      %p74 = scmp.ne.s32.totalorder %s62, %s63
      %p75 = scmp.eq.s32.totalorder %s37, 1
      %p76 = por %p74, %p75
      %p78 = scmp.ne.s32.totalorder %s63, %s77
      %p79 = scmp.eq.s32.totalorder %s37, 0
      %p80 = por %p78, %p79
      %s82 = sadd.s32 %s81, 1
      %p85 = scmp.eq.s32.totalorder %s31, 1
      %p86 = scmp.ne.s32.totalorder %s81, %s83
      %p87 = scmp.eq.s32.totalorder %s31, 0
      %p88 = por %p86, %p87
      %p89 = scmp.ne.s32.totalorder %s81, %s83
      %p90 = scmp.eq.s32.totalorder %s36, 1
      %p91 = por %p89, %p90
      %p92 = scmp.ne.s32.totalorder %s83, %s84
      %p93 = scmp.eq.s32.totalorder %s36, 0
      %p94 = por %p92, %p93
      %p95 = scmp.ne.s32.totalorder %s83, %s84
      %p96 = scmp.eq.s32.totalorder %s37, 1
      %p97 = por %p95, %p96
      %p99 = scmp.ne.s32.totalorder %s84, %s98
      %p100 = scmp.eq.s32.totalorder %s37, 0
      %p101 = por %p99, %p100
      %s103 = sadd.s32 %s102, 1
      %p106 = scmp.eq.s32.totalorder %s31, 1
      %p107 = scmp.ne.s32.totalorder %s102, %s104
      %p108 = scmp.eq.s32.totalorder %s31, 0
      %p109 = por %p107, %p108
      %p110 = scmp.ne.s32.totalorder %s102, %s104
      %p111 = scmp.eq.s32.totalorder %s36, 1
      %p112 = por %p110, %p111
      %p113 = scmp.ne.s32.totalorder %s104, %s105
      %p114 = scmp.eq.s32.totalorder %s36, 0
      %p115 = por %p113, %p114
      %p116 = scmp.ne.s32.totalorder %s104, %s105
      %p117 = scmp.eq.s32.totalorder %s37, 1
      %p118 = por %p116, %p117
      %p120 = scmp.ne.s32.totalorder %s105, %s119
      %p121 = scmp.eq.s32.totalorder %s37, 0
      %p122 = por %p120, %p121
      %s124 = sadd.s32 %s123, 1
      %p127 = scmp.eq.s32.totalorder %s31, 1
      %p128 = scmp.ne.s32.totalorder %s123, %s125
      %p129 = scmp.eq.s32.totalorder %s31, 0
      %p130 = por %p128, %p129
      %p131 = scmp.ne.s32.totalorder %s123, %s125
      %p132 = scmp.eq.s32.totalorder %s36, 1
      %p133 = por %p131, %p132
      %p134 = scmp.ne.s32.totalorder %s125, %s126
      %p135 = scmp.eq.s32.totalorder %s36, 0
      %p136 = por %p134, %p135
      %p137 = scmp.ne.s32.totalorder %s125, %s126
      %p138 = scmp.eq.s32.totalorder %s37, 1
      %p139 = por %p137, %p138
      %p141 = scmp.ne.s32.totalorder %s126, %s140
      %p142 = scmp.eq.s32.totalorder %s37, 0
      %p143 = por %p141, %p142
      %s145 = sadd.s32 %s144, 1
      %p148 = scmp.eq.s32.totalorder %s31, 1
      %p149 = scmp.ne.s32.totalorder %s144, %s146
      %p150 = scmp.eq.s32.totalorder %s31, 0
      %p151 = por %p149, %p150
      %p152 = scmp.ne.s32.totalorder %s144, %s146
      %p153 = scmp.eq.s32.totalorder %s36, 1
      %p154 = por %p152, %p153
      %p155 = scmp.ne.s32.totalorder %s146, %s147
      %p156 = scmp.eq.s32.totalorder %s36, 0
      %p157 = por %p155, %p156
      %p158 = scmp.ne.s32.totalorder %s146, %s147
      %p159 = scmp.eq.s32.totalorder %s37, 1
      %p160 = por %p158, %p159
      %p162 = scmp.ne.s32.totalorder %s147, %s161
      %p163 = scmp.eq.s32.totalorder %s37, 0
      %p164 = por %p162, %p163
      %s166 = sadd.s32 %s165, 1
      %p169 = scmp.eq.s32.totalorder %s31, 1
      %p170 = scmp.ne.s32.totalorder %s165, %s167
      %p171 = scmp.eq.s32.totalorder %s31, 0
      %p172 = por %p170, %p171
      %p173 = scmp.ne.s32.totalorder %s165, %s167
      %p174 = scmp.eq.s32.totalorder %s36, 1
      %p175 = por %p173, %p174
      %p176 = scmp.ne.s32.totalorder %s167, %s168
      %p177 = scmp.eq.s32.totalorder %s36, 0
      %p178 = por %p176, %p177
      %p179 = scmp.ne.s32.totalorder %s167, %s168
      %p180 = scmp.eq.s32.totalorder %s37, 1
      %p181 = por %p179, %p180
      %p183 = scmp.ne.s32.totalorder %s168, %s182
      %p184 = scmp.eq.s32.totalorder %s37, 0
      %p185 = por %p183, %p184
      %s187 = sadd.s32 %s186, 1
      %p190 = scmp.eq.s32.totalorder %s31, 1
      %p191 = scmp.ne.s32.totalorder %s186, %s188
      %p192 = scmp.eq.s32.totalorder %s31, 0
      %p193 = por %p191, %p192
      %p194 = scmp.ne.s32.totalorder %s186, %s188
      %p195 = scmp.eq.s32.totalorder %s36, 1
      %p196 = por %p194, %p195
      %p197 = scmp.ne.s32.totalorder %s188, %s189
      %p198 = scmp.eq.s32.totalorder %s36, 0
      %p199 = por %p197, %p198
      %p200 = scmp.ne.s32.totalorder %s188, %s189
      %p201 = scmp.eq.s32.totalorder %s37, 1
      %p202 = por %p200, %p201
      %p204 = scmp.ne.s32.totalorder %s189, %s203
      %p205 = scmp.eq.s32.totalorder %s37, 0
      %p206 = por %p204, %p205
      %s208 = sadd.s32 %s207, 1
      %p211 = scmp.eq.s32.totalorder %s31, 1
      %p212 = scmp.ne.s32.totalorder %s207, %s209
      %p213 = scmp.eq.s32.totalorder %s31, 0
      %p214 = por %p212, %p213
      %p215 = scmp.ne.s32.totalorder %s207, %s209
      %p216 = scmp.eq.s32.totalorder %s36, 1
      %p217 = por %p215, %p216
      %p218 = scmp.ne.s32.totalorder %s209, %s210
      %p219 = scmp.eq.s32.totalorder %s36, 0
      %p220 = por %p218, %p219
      %p221 = scmp.ne.s32.totalorder %s209, %s210
      %p222 = scmp.eq.s32.totalorder %s37, 1
      %p223 = por %p221, %p222
      %p225 = scmp.ne.s32.totalorder %s210, %s224
      %p226 = scmp.eq.s32.totalorder %s37, 0
      %p227 = por %p225, %p226
      %s228 = ssub.s32 %s31, %s38
      %p229 = scmp.eq.s32.totalorder %s228, 0
      %s231 = sadd.s32 %s230, 1
      %s232 = scalar_select %p229, %s230, %s231
      %p235 = pneg %p229
      %p236 = scmp.eq.s32.totalorder %s31, 1
      %p237 = por %p235, %p236
      %p238 = scmp.ne.s32.totalorder %s230, %s233
      %p239 = scmp.eq.s32.totalorder %s31, 0
      %p240 = por %p238, %p239
      %p241 = scmp.ne.s32.totalorder %s230, %s233
      %p242 = scmp.eq.s32.totalorder %s36, 1
      %p243 = por %p241, %p242
      %p244 = scmp.ne.s32.totalorder %s233, %s234
      %p245 = scmp.eq.s32.totalorder %s36, 0
      %p246 = por %p244, %p245
      %p247 = scmp.ne.s32.totalorder %s233, %s234
      %p248 = scmp.eq.s32.totalorder %s37, 1
      %p249 = por %p247, %p248
      %p251 = scmp.ne.s32.totalorder %s234, %s250
      %p252 = scmp.eq.s32.totalorder %s37, 0
      %p253 = por %p251, %p252
      %s254 = ssub.s32 %s31, %s38
      %p255 = scmp.eq.s32.totalorder %s254, 0
      %s257 = sadd.s32 %s256, 1
      %s258 = scalar_select %p255, %s256, %s257
      %p261 = pneg %p255
      %p262 = scmp.eq.s32.totalorder %s31, 1
      %p263 = por %p261, %p262
      %p264 = scmp.ne.s32.totalorder %s256, %s259
      %p265 = scmp.eq.s32.totalorder %s31, 0
      %p266 = por %p264, %p265
      %p267 = scmp.ne.s32.totalorder %s256, %s259
      %p268 = scmp.eq.s32.totalorder %s36, 1
      %p269 = por %p267, %p268
      %p270 = scmp.ne.s32.totalorder %s259, %s260
      %p271 = scmp.eq.s32.totalorder %s36, 0
      %p272 = por %p270, %p271
      %p273 = scmp.ne.s32.totalorder %s259, %s260
      %p274 = scmp.eq.s32.totalorder %s37, 1
      %p275 = por %p273, %p274
      %p277 = scmp.ne.s32.totalorder %s260, %s276
      %p278 = scmp.eq.s32.totalorder %s37, 0
      %p279 = por %p277, %p278
      %s280 = ssub.s32 %s31, %s38
      %p281 = scmp.eq.s32.totalorder %s280, 0
      %s283 = sadd.s32 %s282, 1
      %s284 = scalar_select %p281, %s282, %s283
      %p287 = pneg %p281
      %p288 = scmp.eq.s32.totalorder %s31, 1
      %p289 = por %p287, %p288
      %p290 = scmp.ne.s32.totalorder %s282, %s285
      %p291 = scmp.eq.s32.totalorder %s31, 0
      %p292 = por %p290, %p291
      %p293 = scmp.ne.s32.totalorder %s282, %s285
      %p294 = scmp.eq.s32.totalorder %s36, 1
      %p295 = por %p293, %p294
      %p296 = scmp.ne.s32.totalorder %s285, %s286
      %p297 = scmp.eq.s32.totalorder %s36, 0
      %p298 = por %p296, %p297
      %p299 = scmp.ne.s32.totalorder %s285, %s286
      %p300 = scmp.eq.s32.totalorder %s37, 1
      %p301 = por %p299, %p300
      %p303 = scmp.ne.s32.totalorder %s286, %s302
      %p304 = scmp.eq.s32.totalorder %s37, 0
      %p305 = por %p303, %p304
      %s306 = ssub.s32 %s31, %s38
      %p307 = scmp.eq.s32.totalorder %s306, 0
      %s309 = sadd.s32 %s308, 1
      %s310 = scalar_select %p307, %s308, %s309
      %p313 = pneg %p307
      %p314 = scmp.eq.s32.totalorder %s31, 1
      %p315 = por %p313, %p314
      %p316 = scmp.ne.s32.totalorder %s308, %s311
      %p317 = scmp.eq.s32.totalorder %s31, 0
      %p318 = por %p316, %p317
      %p319 = scmp.ne.s32.totalorder %s308, %s311
      %p320 = scmp.eq.s32.totalorder %s36, 1
      %p321 = por %p319, %p320
      %p322 = scmp.ne.s32.totalorder %s311, %s312
      %p323 = scmp.eq.s32.totalorder %s36, 0
      %p324 = por %p322, %p323
      %p325 = scmp.ne.s32.totalorder %s311, %s312
      %p326 = scmp.eq.s32.totalorder %s37, 1
      %p327 = por %p325, %p326
      %p329 = scmp.ne.s32.totalorder %s312, %s328
      %p330 = scmp.eq.s32.totalorder %s37, 0
      %p331 = por %p329, %p330
      %s332 = ssub.s32 %s31, %s38
      %p333 = scmp.eq.s32.totalorder %s332, 0
      %s335 = sadd.s32 %s334, 1
      %s336 = scalar_select %p333, %s334, %s335
      %p339 = pneg %p333
      %p340 = scmp.eq.s32.totalorder %s31, 1
      %p341 = por %p339, %p340
      %p342 = scmp.ne.s32.totalorder %s334, %s337
      %p343 = scmp.eq.s32.totalorder %s31, 0
      %p344 = por %p342, %p343
      %p345 = scmp.ne.s32.totalorder %s334, %s337
      %p346 = scmp.eq.s32.totalorder %s36, 1
      %p347 = por %p345, %p346
      %p348 = scmp.ne.s32.totalorder %s337, %s338
      %p349 = scmp.eq.s32.totalorder %s36, 0
      %p350 = por %p348, %p349
      %p351 = scmp.ne.s32.totalorder %s337, %s338
      %p352 = scmp.eq.s32.totalorder %s37, 1
      %p353 = por %p351, %p352
      %p355 = scmp.ne.s32.totalorder %s338, %s354
      %p356 = scmp.eq.s32.totalorder %s37, 0
      %p357 = por %p355, %p356
      %s358 = ssub.s32 %s31, %s38
      %p359 = scmp.eq.s32.totalorder %s358, 0
      %s361 = sadd.s32 %s360, 1
      %s362 = scalar_select %p359, %s360, %s361
      %p365 = pneg %p359
      %p366 = scmp.eq.s32.totalorder %s31, 1
      %p367 = por %p365, %p366
      %p368 = scmp.ne.s32.totalorder %s360, %s363
      %p369 = scmp.eq.s32.totalorder %s31, 0
      %p370 = por %p368, %p369
      %p371 = scmp.ne.s32.totalorder %s360, %s363
      %p372 = scmp.eq.s32.totalorder %s36, 1
      %p373 = por %p371, %p372
      %p374 = scmp.ne.s32.totalorder %s363, %s364
      %p375 = scmp.eq.s32.totalorder %s36, 0
      %p376 = por %p374, %p375
      %p377 = scmp.ne.s32.totalorder %s363, %s364
      %p378 = scmp.eq.s32.totalorder %s37, 1
      %p379 = por %p377, %p378
      %p381 = scmp.ne.s32.totalorder %s364, %s380
      %p382 = scmp.eq.s32.totalorder %s37, 0
      %p383 = por %p381, %p382
      %s384 = ssub.s32 %s31, %s38
      %p385 = scmp.eq.s32.totalorder %s384, 0
      %s387 = sadd.s32 %s386, 1
      %s388 = scalar_select %p385, %s386, %s387
      %p391 = pneg %p385
      %p392 = scmp.eq.s32.totalorder %s31, 1
      %p393 = por %p391, %p392
      %p394 = scmp.ne.s32.totalorder %s386, %s389
      %p395 = scmp.eq.s32.totalorder %s31, 0
      %p396 = por %p394, %p395
      %p397 = scmp.ne.s32.totalorder %s386, %s389
      %p398 = scmp.eq.s32.totalorder %s36, 1
      %p399 = por %p397, %p398
      %p400 = scmp.ne.s32.totalorder %s389, %s390
      %p401 = scmp.eq.s32.totalorder %s36, 0
      %p402 = por %p400, %p401
      %p403 = scmp.ne.s32.totalorder %s389, %s390
      %p404 = scmp.eq.s32.totalorder %s37, 1
      %p405 = por %p403, %p404
      %p407 = scmp.ne.s32.totalorder %s390, %s406
      %p408 = scmp.eq.s32.totalorder %s37, 0
      %p409 = por %p407, %p408
      %s410 = ssub.s32 %s31, %s38
      %p411 = scmp.eq.s32.totalorder %s410, 0
      %s413 = sadd.s32 %s412, 1
      %s414 = scalar_select %p411, %s412, %s413
      %p417 = pneg %p411
      %p418 = scmp.eq.s32.totalorder %s31, 1
      %p419 = por %p417, %p418
      %p420 = scmp.ne.s32.totalorder %s412, %s415
      %p421 = scmp.eq.s32.totalorder %s31, 0
      %p422 = por %p420, %p421
      %p423 = scmp.ne.s32.totalorder %s412, %s415
      %p424 = scmp.eq.s32.totalorder %s36, 1
      %p425 = por %p423, %p424
      %p426 = scmp.ne.s32.totalorder %s415, %s416
      %p427 = scmp.eq.s32.totalorder %s36, 0
      %p428 = por %p426, %p427
      %p429 = scmp.ne.s32.totalorder %s415, %s416
      %p430 = scmp.eq.s32.totalorder %s37, 1
      %p431 = por %p429, %p430
      %p433 = scmp.ne.s32.totalorder %s416, %s432
      %p434 = scmp.eq.s32.totalorder %s37, 0
      %p435 = por %p433, %p434
      %s436 = ssub.s32 %s31, %s38
      %p437 = scmp.eq.s32.totalorder %s436, 0
      %s439 = sadd.s32 %s438, 1
      %s440 = scalar_select %p437, %s438, %s439
      %p443 = pneg %p437
      %p444 = scmp.eq.s32.totalorder %s31, 1
      %p445 = por %p443, %p444
      %p446 = scmp.ne.s32.totalorder %s438, %s441
      %p447 = scmp.eq.s32.totalorder %s31, 0
      %p448 = por %p446, %p447
      %p449 = scmp.ne.s32.totalorder %s438, %s441
      %p450 = scmp.eq.s32.totalorder %s36, 1
      %p451 = por %p449, %p450
      %p452 = scmp.ne.s32.totalorder %s441, %s442
      %p453 = scmp.eq.s32.totalorder %s36, 0
      %p454 = por %p452, %p453
      %p455 = scmp.ne.s32.totalorder %s441, %s442
      %p456 = scmp.eq.s32.totalorder %s37, 1
      %p457 = por %p455, %p456
      %p459 = scmp.ne.s32.totalorder %s442, %s458
      %p460 = scmp.eq.s32.totalorder %s37, 0
      %p461 = por %p459, %p460
      %s462 = ssub.s32 %s31, %s38
      %p463 = scmp.eq.s32.totalorder %s462, 0
      %s465 = sadd.s32 %s464, 1
      %s466 = scalar_select %p463, %s464, %s465
      %p469 = pneg %p463
      %p470 = scmp.eq.s32.totalorder %s31, 1
      %p471 = por %p469, %p470
      %p472 = scmp.ne.s32.totalorder %s464, %s467
      %p473 = scmp.eq.s32.totalorder %s31, 0
      %p474 = por %p472, %p473
      %p475 = scmp.ne.s32.totalorder %s464, %s467
      %p476 = scmp.eq.s32.totalorder %s36, 1
      %p477 = por %p475, %p476
      %p478 = scmp.ne.s32.totalorder %s467, %s468
      %p479 = scmp.eq.s32.totalorder %s36, 0
      %p480 = por %p478, %p479
      %p481 = scmp.ne.s32.totalorder %s467, %s468
      %p482 = scmp.eq.s32.totalorder %s37, 1
      %p483 = por %p481, %p482
      %p485 = scmp.ne.s32.totalorder %s468, %s484
      %p486 = scmp.eq.s32.totalorder %s37, 0
      %p487 = por %p485, %p486
      %s489 = sadd.s32 %s488, 1
      %p492 = scmp.eq.s32.totalorder %s31, 1
      %p493 = scmp.ne.s32.totalorder %s488, %s490
      %p494 = scmp.eq.s32.totalorder %s31, 0
      %p495 = por %p493, %p494
      %p496 = scmp.ne.s32.totalorder %s488, %s490
      %p497 = scmp.eq.s32.totalorder %s36, 1
      %p498 = por %p496, %p497
      %p499 = scmp.ne.s32.totalorder %s490, %s491
      %p500 = scmp.eq.s32.totalorder %s36, 0
      %p501 = por %p499, %p500
      %p502 = scmp.ne.s32.totalorder %s490, %s491
      %p503 = scmp.eq.s32.totalorder %s37, 1
      %p504 = por %p502, %p503
      %p506 = scmp.ne.s32.totalorder %s491, %s505
      %p507 = scmp.eq.s32.totalorder %s37, 0
      %p508 = por %p506, %p507
      %s510 = sadd.s32 %s509, 1
      %p513 = scmp.eq.s32.totalorder %s31, 1
      %p514 = scmp.ne.s32.totalorder %s509, %s511
      %p515 = scmp.eq.s32.totalorder %s31, 0
      %p516 = por %p514, %p515
      %p517 = scmp.ne.s32.totalorder %s509, %s511
      %p518 = scmp.eq.s32.totalorder %s36, 1
      %p519 = por %p517, %p518
      %p520 = scmp.ne.s32.totalorder %s511, %s512
      %p521 = scmp.eq.s32.totalorder %s36, 0
      %p522 = por %p520, %p521
      %p523 = scmp.ne.s32.totalorder %s511, %s512
      %p524 = scmp.eq.s32.totalorder %s37, 1
      %p525 = por %p523, %p524
      %p527 = scmp.ne.s32.totalorder %s512, %s526
      %p528 = scmp.eq.s32.totalorder %s37, 0
      %p529 = por %p527, %p528
      %s531 = sadd.s32 %s530, 1
      %p534 = scmp.eq.s32.totalorder %s31, 1
      %p535 = scmp.ne.s32.totalorder %s530, %s532
      %p536 = scmp.eq.s32.totalorder %s31, 0
      %p537 = por %p535, %p536
      %p538 = scmp.ne.s32.totalorder %s530, %s532
      %p539 = scmp.eq.s32.totalorder %s36, 1
      %p540 = por %p538, %p539
      %p541 = scmp.ne.s32.totalorder %s532, %s533
      %p542 = scmp.eq.s32.totalorder %s36, 0
      %p543 = por %p541, %p542
      %p544 = scmp.ne.s32.totalorder %s532, %s533
      %p545 = scmp.eq.s32.totalorder %s37, 1
      %p546 = por %p544, %p545
      %p548 = scmp.ne.s32.totalorder %s533, %s547
      %p549 = scmp.eq.s32.totalorder %s37, 0
      %p550 = por %p548, %p549
      %p551 = scmp.le.s32.totalorder 1, %s31
      %p552 = scmp.lt.s32.totalorder %s31, 3
      %p553 = pnand %p551, %p552
      %p554 = pneg %p553
      // Predicated region
      $region9: #{textnet_forward.1} parent=5 // pred_check
        _
      $region10: #{textnet_forward.1} parent=5 // pred_check_branch
        %556 = sbr.rel (%p553) target = $region12
      $region11: #{textnet_forward.1} parent=5 // pred_region
        %s557 = ssub.s32 %s31, 1
        // Predicated region
        $region13: #{textnet_forward.1} parent=11 // pred_check
          %p558 = pneg %p52
        $region14: #{textnet_forward.1} parent=11 // pred_check_branch
          %560 = sbr.rel (%p558) target = $region16
        $region15: #{textnet_forward.1} parent=11 // pred_region
          _
        $region16: #{textnet_forward.1} parent=11 // pred_fallthru
          _
        // Predicated region
        $region17: #{textnet_forward.1} parent=11 // pred_check
          %p561 = pneg %p73
        $region18: #{textnet_forward.1} parent=11 // pred_check_branch
          %563 = sbr.rel (%p561) target = $region20
        $region19: #{textnet_forward.1} parent=11 // pred_region
          _
        $region20: #{textnet_forward.1} parent=11 // pred_fallthru
          _
        // Predicated region
        $region21: #{textnet_forward.1} parent=11 // pred_check
          %p564 = pneg %p94
        $region22: #{textnet_forward.1} parent=11 // pred_check_branch
          %566 = sbr.rel (%p564) target = $region24
        $region23: #{textnet_forward.1} parent=11 // pred_region
          _
        $region24: #{textnet_forward.1} parent=11 // pred_fallthru
          _
        // Predicated region
        $region25: #{textnet_forward.1} parent=11 // pred_check
          %p567 = pneg %p115
        $region26: #{textnet_forward.1} parent=11 // pred_check_branch
          %569 = sbr.rel (%p567) target = $region28
        $region27: #{textnet_forward.1} parent=11 // pred_region
          _
        $region28: #{textnet_forward.1} parent=11 // pred_fallthru
          _
        // Predicated region
        $region29: #{textnet_forward.1} parent=11 // pred_check
          %p570 = pneg %p136
        $region30: #{textnet_forward.1} parent=11 // pred_check_branch
          %572 = sbr.rel (%p570) target = $region32
        $region31: #{textnet_forward.1} parent=11 // pred_region
          %574 = vsyncadd [#allocation4], 0
          %s575 = sshll.u32 %s4, 4
          %s576 = int_to_ptr.hbm [resolvable:$true] %s575
          %s577 = sshll.u32 [#allocation3], 4
          %s578 = int_to_ptr.vmem [resolvable:$true] %s577
          %583 = dma.hbm_to_vmem [thread:$0]  %s576, 256, %s578, [#allocation4], 128, 128, 8
        $region32: #{textnet_forward.1} parent=11 // pred_fallthru
          _
        // Predicated region
        $region33: #{textnet_forward.1} parent=11 // pred_check
          %p584 = pneg %p157
        $region34: #{textnet_forward.1} parent=11 // pred_check_branch
          %586 = sbr.rel (%p584) target = $region36
        $region35: #{textnet_forward.1} parent=11 // pred_region
          %588 = vsyncadd [#allocation7], 0
          %s590 = sshll.u32 %s5, 4
          %s591 = int_to_ptr.hbm [resolvable:$true] %s590
          %s592 = sshll.u32 [#allocation6], 4
          %s593 = int_to_ptr.vmem [resolvable:$true] %s592
          %595 = dma.hbm_to_vmem [thread:$0]  %s591, 32, %s593, [#allocation7]
        $region36: #{textnet_forward.1} parent=11 // pred_fallthru
          _
        // Predicated region
        $region37: #{textnet_forward.1} parent=11 // pred_check
          %p596 = pneg %p178
        $region38: #{textnet_forward.1} parent=11 // pred_check_branch
          %598 = sbr.rel (%p596) target = $region40
        $region39: #{textnet_forward.1} parent=11 // pred_region
          %600 = vsyncadd [#allocation7], 0
          %s602 = sshll.u32 %s6, 4
          %s603 = int_to_ptr.hbm [resolvable:$true] %s602
          %s604 = sshll.u32 [#allocation8], 4
          %s605 = int_to_ptr.vmem [resolvable:$true] %s604
          %607 = dma.hbm_to_vmem [thread:$0]  %s603, 32, %s605, [#allocation7]
        $region40: #{textnet_forward.1} parent=11 // pred_fallthru
          _
        // Predicated region
        $region41: #{textnet_forward.1} parent=11 // pred_check
          %p608 = pneg %p199
        $region42: #{textnet_forward.1} parent=11 // pred_check_branch
          %610 = sbr.rel (%p608) target = $region44
        $region43: #{textnet_forward.1} parent=11 // pred_region
          _
        $region44: #{textnet_forward.1} parent=11 // pred_fallthru
          _
        // Predicated region
        $region45: #{textnet_forward.1} parent=11 // pred_check
          %p611 = pneg %p220
        $region46: #{textnet_forward.1} parent=11 // pred_check_branch
          %613 = sbr.rel (%p611) target = $region48
        $region47: #{textnet_forward.1} parent=11 // pred_region
          %615 = vsyncadd [#allocation10], 0
          %s616 = sshll.u32 %s8, 4
          %s617 = int_to_ptr.hbm [resolvable:$true] %s616
          %s618 = sshll.u32 [#allocation9], 4
          %s619 = int_to_ptr.vmem [resolvable:$true] %s618
          %624 = dma.hbm_to_vmem [thread:$0]  %s617, 1024, %s619, [#allocation10], 128, 128, 8
        $region48: #{textnet_forward.1} parent=11 // pred_fallthru
          _
        // Predicated region
        $region49: #{textnet_forward.1} parent=11 // pred_check
          %p625 = pneg %p501
        $region50: #{textnet_forward.1} parent=11 // pred_check_branch
          %627 = sbr.rel (%p625) target = $region52
        $region51: #{textnet_forward.1} parent=11 // pred_region
          %629 = vsyncadd [#allocation7], 0
          %s630 = sshll.u32 %s19, 4
          %s631 = int_to_ptr.hbm [resolvable:$true] %s630
          %s632 = sshll.u32 [#allocation19], 4
          %s633 = int_to_ptr.vmem [resolvable:$true] %s632
          %638 = dma.hbm_to_vmem [thread:$0]  %s631, 1024, %s633, [#allocation7], 64, 64, 4
        $region52: #{textnet_forward.1} parent=11 // pred_fallthru
          _
        // Predicated region
        $region53: #{textnet_forward.1} parent=11 // pred_check
          %p639 = pneg %p522
        $region54: #{textnet_forward.1} parent=11 // pred_check_branch
          %641 = sbr.rel (%p639) target = $region56
        $region55: #{textnet_forward.1} parent=11 // pred_region
          %643 = vsyncadd [#allocation10], 0
          %s645 = sshll.u32 %s20, 4
          %s646 = int_to_ptr.hbm [resolvable:$true] %s645
          %s647 = sshll.u32 [#allocation20], 4
          %s648 = int_to_ptr.vmem [resolvable:$true] %s647
          %650 = dma.hbm_to_vmem [thread:$0]  %s646, 16, %s648, [#allocation10]
        $region56: #{textnet_forward.1} parent=11 // pred_fallthru
          _
      $region12: #{textnet_forward.1} parent=5 // pred_fallthru
        _
      %p651 = scmp.lt.s32.totalorder %s31, 2
      // Predicated region
      $region57: #{textnet_forward.1} parent=5 // pred_check
        %p652 = pneg %p651
      $region58: #{textnet_forward.1} parent=5 // pred_check_branch
        %654 = sbr.rel (%p652) target = $region60
      $region59: #{textnet_forward.1} parent=5 // pred_region
        // Predicated region
        $region61: #{textnet_forward.1} parent=59 // pred_check
          %p655 = pneg %p240
        $region62: #{textnet_forward.1} parent=59 // pred_check_branch
          %657 = sbr.rel (%p655) target = $region64
        $region63: #{textnet_forward.1} parent=59 // pred_region
          %s658 = sand.u32 %s31, 1
          %s659 = scalar_lea.sflag [#allocation4], %s658
          %s660 = sand.u32 %s230, 1
          %s661 = smul.addr %s660, 192
          %s662 = scalar_lea.vmem [#allocation11], %s661
          %664 = vsyncadd %s659, 0
          %s665 = smul.addr %s31, 48
          %s666 = smul.addr %s665, 4
          %s667 = scalar_lea.hbm %s9, %s666
          %s668 = sshll.u32 %s667, 4
          %s669 = int_to_ptr.hbm [resolvable:$true] %s668
          %s670 = sshll.u32 %s662, 4
          %s671 = int_to_ptr.vmem [resolvable:$true] %s670
          %676 = dma.hbm_to_vmem [thread:$0]  %s669, 3072, %s671, %s659, 192, 192, 12
        $region64: #{textnet_forward.1} parent=59 // pred_fallthru
          _
        // Predicated region
        $region65: #{textnet_forward.1} parent=59 // pred_check
          %p677 = pneg %p266
        $region66: #{textnet_forward.1} parent=59 // pred_check_branch
          %679 = sbr.rel (%p677) target = $region68
        $region67: #{textnet_forward.1} parent=59 // pred_region
          %p680 = scmp.lt.s32.totalorder %s31, 1
          %s681 = scalar_select %p680, %s31, 1
          %s682 = smul.addr %s681, 3
          %s683 = scalar_lea.vmem %s10, %s682
        $region68: #{textnet_forward.1} parent=59 // pred_fallthru
          _
        // Predicated region
        $region69: #{textnet_forward.1} parent=59 // pred_check
          %p684 = pneg %p292
        $region70: #{textnet_forward.1} parent=59 // pred_check_branch
          %686 = sbr.rel (%p684) target = $region72
        $region71: #{textnet_forward.1} parent=59 // pred_region
          %s687 = sand.u32 %s31, 1
          %s688 = scalar_lea.sflag [#allocation4], %s687
          %s689 = sand.u32 %s282, 1
          %s690 = smul.addr %s689, 64
          %s691 = scalar_lea.vmem [#allocation12], %s690
          %693 = vsyncadd %s688, 0
          %s694 = smul.addr %s31, 16
          %s695 = smul.addr %s694, 4
          %s696 = scalar_lea.hbm %s11, %s695
          %s697 = sshll.u32 %s696, 4
          %s698 = int_to_ptr.hbm [resolvable:$true] %s697
          %s699 = sshll.u32 %s691, 4
          %s700 = int_to_ptr.vmem [resolvable:$true] %s699
          %705 = dma.hbm_to_vmem [thread:$0]  %s698, 1024, %s700, %s688, 64, 64, 4
        $region72: #{textnet_forward.1} parent=59 // pred_fallthru
          _
        // Predicated region
        $region73: #{textnet_forward.1} parent=59 // pred_check
          %p706 = pneg %p318
        $region74: #{textnet_forward.1} parent=59 // pred_check_branch
          %708 = sbr.rel (%p706) target = $region76
        $region75: #{textnet_forward.1} parent=59 // pred_region
          %s709 = sand.u32 %s31, 1
          %s710 = scalar_lea.sflag [#allocation4], %s709
          %s711 = sand.u32 %s308, 1
          %s712 = scalar_lea.vmem [#allocation13], %s711
          %714 = vsyncadd %s710, 0
          %s715 = scalar_lea.hbm %s12, %s31
          %s717 = sshll.u32 %s715, 4
          %s718 = int_to_ptr.hbm [resolvable:$true] %s717
          %s719 = sshll.u32 %s712, 4
          %s720 = int_to_ptr.vmem [resolvable:$true] %s719
          %722 = dma.hbm_to_vmem [thread:$0]  %s718, 16, %s720, %s710
        $region76: #{textnet_forward.1} parent=59 // pred_fallthru
          _
        // Predicated region
        $region77: #{textnet_forward.1} parent=59 // pred_check
          %p723 = pneg %p344
        $region78: #{textnet_forward.1} parent=59 // pred_check_branch
          %725 = sbr.rel (%p723) target = $region80
        $region79: #{textnet_forward.1} parent=59 // pred_region
          %p726 = scmp.lt.s32.totalorder %s31, 1
          %s727 = scalar_select %p726, %s31, 1
          %s728 = smul.addr %s727, 2
          %s729 = scalar_lea.vmem %s13, %s728
        $region80: #{textnet_forward.1} parent=59 // pred_fallthru
          _
        // Predicated region
        $region81: #{textnet_forward.1} parent=59 // pred_check
          %p730 = pneg %p370
        $region82: #{textnet_forward.1} parent=59 // pred_check_branch
          %732 = sbr.rel (%p730) target = $region84
        $region83: #{textnet_forward.1} parent=59 // pred_region
          %s733 = sand.u32 %s31, 1
          %s734 = scalar_lea.sflag [#allocation4], %s733
          %s735 = sand.u32 %s360, 1
          %s736 = smul.addr %s735, 128
          %s737 = scalar_lea.vmem [#allocation14], %s736
          %739 = vsyncadd %s734, 0
          %s740 = smul.addr %s31, 32
          %s741 = smul.addr %s740, 4
          %s742 = scalar_lea.hbm %s14, %s741
          %s743 = sshll.u32 %s742, 4
          %s744 = int_to_ptr.hbm [resolvable:$true] %s743
          %s745 = sshll.u32 %s737, 4
          %s746 = int_to_ptr.vmem [resolvable:$true] %s745
          %751 = dma.hbm_to_vmem [thread:$0]  %s744, 2048, %s746, %s734, 128, 128, 8
        $region84: #{textnet_forward.1} parent=59 // pred_fallthru
          _
        // Predicated region
        $region85: #{textnet_forward.1} parent=59 // pred_check
          %p752 = pneg %p396
        $region86: #{textnet_forward.1} parent=59 // pred_check_branch
          %754 = sbr.rel (%p752) target = $region88
        $region87: #{textnet_forward.1} parent=59 // pred_region
          %s755 = sand.u32 %s31, 1
          %s756 = scalar_lea.sflag [#allocation4], %s755
          %s757 = sand.u32 %s386, 1
          %s758 = smul.addr %s757, 2
          %s759 = scalar_lea.vmem [#allocation15], %s758
          %761 = vsyncadd %s756, 0
          %s762 = smul.addr %s31, 2
          %s763 = scalar_lea.hbm %s15, %s762
          %s765 = sshll.u32 %s763, 4
          %s766 = int_to_ptr.hbm [resolvable:$true] %s765
          %s767 = sshll.u32 %s759, 4
          %s768 = int_to_ptr.vmem [resolvable:$true] %s767
          %770 = dma.hbm_to_vmem [thread:$0]  %s766, 32, %s768, %s756
        $region88: #{textnet_forward.1} parent=59 // pred_fallthru
          _
        // Predicated region
        $region89: #{textnet_forward.1} parent=59 // pred_check
          %p771 = pneg %p422
        $region90: #{textnet_forward.1} parent=59 // pred_check_branch
          %773 = sbr.rel (%p771) target = $region92
        $region91: #{textnet_forward.1} parent=59 // pred_region
          %s774 = sand.u32 %s31, 1
          %s775 = scalar_lea.sflag [#allocation4], %s774
          %s776 = sand.u32 %s412, 1
          %s777 = smul.addr %s776, 128
          %s778 = scalar_lea.vmem [#allocation16], %s777
          %780 = vsyncadd %s775, 0
          %s781 = smul.addr %s31, 32
          %s782 = smul.addr %s781, 4
          %s783 = scalar_lea.hbm %s16, %s782
          %s784 = sshll.u32 %s783, 4
          %s785 = int_to_ptr.hbm [resolvable:$true] %s784
          %s786 = sshll.u32 %s778, 4
          %s787 = int_to_ptr.vmem [resolvable:$true] %s786
          %792 = dma.hbm_to_vmem [thread:$0]  %s785, 2048, %s787, %s775, 64, 64, 4
        $region92: #{textnet_forward.1} parent=59 // pred_fallthru
          _
        // Predicated region
        $region93: #{textnet_forward.1} parent=59 // pred_check
          %p793 = pneg %p448
        $region94: #{textnet_forward.1} parent=59 // pred_check_branch
          %795 = sbr.rel (%p793) target = $region96
        $region95: #{textnet_forward.1} parent=59 // pred_region
          %s796 = sand.u32 %s31, 1
          %s797 = scalar_lea.sflag [#allocation4], %s796
          %s798 = sand.u32 %s438, 1
          %s799 = scalar_lea.vmem [#allocation17], %s798
          %801 = vsyncadd %s797, 0
          %s802 = scalar_lea.hbm %s17, %s31
          %s804 = sshll.u32 %s802, 4
          %s805 = int_to_ptr.hbm [resolvable:$true] %s804
          %s806 = sshll.u32 %s799, 4
          %s807 = int_to_ptr.vmem [resolvable:$true] %s806
          %809 = dma.hbm_to_vmem [thread:$0]  %s805, 16, %s807, %s797
        $region96: #{textnet_forward.1} parent=59 // pred_fallthru
          _
        // Predicated region
        $region97: #{textnet_forward.1} parent=59 // pred_check
          %p810 = pneg %p474
        $region98: #{textnet_forward.1} parent=59 // pred_check_branch
          %812 = sbr.rel (%p810) target = $region100
        $region99: #{textnet_forward.1} parent=59 // pred_region
          %s813 = sand.u32 %s31, 1
          %s814 = scalar_lea.sflag [#allocation4], %s813
          %s815 = sand.u32 %s464, 1
          %s816 = smul.addr %s815, 2
          %s817 = scalar_lea.vmem [#allocation18], %s816
          %819 = vsyncadd %s814, 0
          %s820 = smul.addr %s31, 2
          %s821 = scalar_lea.hbm %s18, %s820
          %s823 = sshll.u32 %s821, 4
          %s824 = int_to_ptr.hbm [resolvable:$true] %s823
          %s825 = sshll.u32 %s817, 4
          %s826 = int_to_ptr.vmem [resolvable:$true] %s825
          %828 = dma.hbm_to_vmem [thread:$0]  %s824, 32, %s826, %s814
        $region100: #{textnet_forward.1} parent=59 // pred_fallthru
          _
      $region60: #{textnet_forward.1} parent=5 // pred_fallthru
        _
      %p829 = scmp.le.s32.totalorder 1, %s31
      %p830 = scmp.lt.s32.totalorder %s31, 3
      %p831 = pnand %p829, %p830
      %p832 = pneg %p831
      // Predicated region
      $region101: #{textnet_forward.1} parent=5 // pred_check
        _
      $region102: #{textnet_forward.1} parent=5 // pred_check_branch
        %834 = sbr.rel (%p831) target = $region104
      $region103: #{textnet_forward.1} parent=5 // pred_region
        %s835 = ssub.s32 %s31, 1
        // Predicated region
        $region105: #{textnet_forward.1} parent=103 // pred_check
          %p836 = pneg %p136
        $region106: #{textnet_forward.1} parent=103 // pred_check_branch
          %838 = sbr.rel (%p836) target = $region108
        $region107: #{textnet_forward.1} parent=103 // pred_region
          %840 = dma.done [#allocation4], 256
        $region108: #{textnet_forward.1} parent=103 // pred_fallthru
          _
        // Predicated region
        $region109: #{textnet_forward.1} parent=103 // pred_check
          %p841 = pneg %p157
        $region110: #{textnet_forward.1} parent=103 // pred_check_branch
          %843 = sbr.rel (%p841) target = $region112
        $region111: #{textnet_forward.1} parent=103 // pred_region
          %845 = dma.done [#allocation7], 32
        $region112: #{textnet_forward.1} parent=103 // pred_fallthru
          _
        // Predicated region
        $region113: #{textnet_forward.1} parent=103 // pred_check
          %p846 = pneg %p178
        $region114: #{textnet_forward.1} parent=103 // pred_check_branch
          %848 = sbr.rel (%p846) target = $region116
        $region115: #{textnet_forward.1} parent=103 // pred_region
          %850 = dma.done [#allocation7], 32
        $region116: #{textnet_forward.1} parent=103 // pred_fallthru
          _
        // Predicated region
        $region117: #{textnet_forward.1} parent=103 // pred_check
          %p851 = pneg %p220
        $region118: #{textnet_forward.1} parent=103 // pred_check_branch
          %853 = sbr.rel (%p851) target = $region120
        $region119: #{textnet_forward.1} parent=103 // pred_region
          %855 = dma.done [#allocation10], 1024
        $region120: #{textnet_forward.1} parent=103 // pred_fallthru
          _
        %s856 = sand.u32 %s36, 1
        %s857 = scalar_lea.sflag [#allocation4], %s856
        %s858 = sand.u32 %s233, 1
        %s859 = smul.addr %s858, 192
        %s860 = scalar_lea.vmem [#allocation11], %s859
        // Predicated region
        $region121: #{textnet_forward.1} parent=103 // pred_check
          %p861 = pneg %p246
        $region122: #{textnet_forward.1} parent=103 // pred_check_branch
          %863 = sbr.rel (%p861) target = $region124
        $region123: #{textnet_forward.1} parent=103 // pred_region
          %865 = dma.done %s857, 3072
        $region124: #{textnet_forward.1} parent=103 // pred_fallthru
          _
        %s866 = sand.u32 %s36, 1
        %s867 = scalar_lea.sflag [#allocation4], %s866
        %s868 = sand.u32 %s285, 1
        %s869 = smul.addr %s868, 64
        %s870 = scalar_lea.vmem [#allocation12], %s869
        // Predicated region
        $region125: #{textnet_forward.1} parent=103 // pred_check
          %p871 = pneg %p298
        $region126: #{textnet_forward.1} parent=103 // pred_check_branch
          %873 = sbr.rel (%p871) target = $region128
        $region127: #{textnet_forward.1} parent=103 // pred_region
          %875 = dma.done %s867, 1024
        $region128: #{textnet_forward.1} parent=103 // pred_fallthru
          _
        %s876 = sand.u32 %s36, 1
        %s877 = scalar_lea.sflag [#allocation4], %s876
        %s878 = sand.u32 %s311, 1
        %s879 = scalar_lea.vmem [#allocation13], %s878
        // Predicated region
        $region129: #{textnet_forward.1} parent=103 // pred_check
          %p880 = pneg %p324
        $region130: #{textnet_forward.1} parent=103 // pred_check_branch
          %882 = sbr.rel (%p880) target = $region132
        $region131: #{textnet_forward.1} parent=103 // pred_region
          %884 = dma.done %s877, 16
        $region132: #{textnet_forward.1} parent=103 // pred_fallthru
          _
        %s885 = sand.u32 %s36, 1
        %s886 = scalar_lea.sflag [#allocation4], %s885
        %s887 = sand.u32 %s363, 1
        %s888 = smul.addr %s887, 128
        %s889 = scalar_lea.vmem [#allocation14], %s888
        // Predicated region
        $region133: #{textnet_forward.1} parent=103 // pred_check
          %p890 = pneg %p376
        $region134: #{textnet_forward.1} parent=103 // pred_check_branch
          %892 = sbr.rel (%p890) target = $region136
        $region135: #{textnet_forward.1} parent=103 // pred_region
          %894 = dma.done %s886, 2048
        $region136: #{textnet_forward.1} parent=103 // pred_fallthru
          _
        %s895 = sand.u32 %s36, 1
        %s896 = scalar_lea.sflag [#allocation4], %s895
        %s897 = sand.u32 %s389, 1
        %s898 = smul.addr %s897, 2
        %s899 = scalar_lea.vmem [#allocation15], %s898
        // Predicated region
        $region137: #{textnet_forward.1} parent=103 // pred_check
          %p900 = pneg %p402
        $region138: #{textnet_forward.1} parent=103 // pred_check_branch
          %902 = sbr.rel (%p900) target = $region140
        $region139: #{textnet_forward.1} parent=103 // pred_region
          %904 = dma.done %s896, 32
        $region140: #{textnet_forward.1} parent=103 // pred_fallthru
          _
        %s905 = sand.u32 %s36, 1
        %s906 = scalar_lea.sflag [#allocation4], %s905
        %s907 = sand.u32 %s415, 1
        %s908 = smul.addr %s907, 128
        %s909 = scalar_lea.vmem [#allocation16], %s908
        // Predicated region
        $region141: #{textnet_forward.1} parent=103 // pred_check
          %p910 = pneg %p428
        $region142: #{textnet_forward.1} parent=103 // pred_check_branch
          %912 = sbr.rel (%p910) target = $region144
        $region143: #{textnet_forward.1} parent=103 // pred_region
          %914 = dma.done %s906, 2048
        $region144: #{textnet_forward.1} parent=103 // pred_fallthru
          _
        %s915 = sand.u32 %s36, 1
        %s916 = scalar_lea.sflag [#allocation4], %s915
        %s917 = sand.u32 %s441, 1
        %s918 = scalar_lea.vmem [#allocation17], %s917
        // Predicated region
        $region145: #{textnet_forward.1} parent=103 // pred_check
          %p919 = pneg %p454
        $region146: #{textnet_forward.1} parent=103 // pred_check_branch
          %921 = sbr.rel (%p919) target = $region148
        $region147: #{textnet_forward.1} parent=103 // pred_region
          %923 = dma.done %s916, 16
        $region148: #{textnet_forward.1} parent=103 // pred_fallthru
          _
        %s924 = sand.u32 %s36, 1
        %s925 = scalar_lea.sflag [#allocation4], %s924
        %s926 = sand.u32 %s467, 1
        %s927 = smul.addr %s926, 2
        %s928 = scalar_lea.vmem [#allocation18], %s927
        // Predicated region
        $region149: #{textnet_forward.1} parent=103 // pred_check
          %p929 = pneg %p480
        $region150: #{textnet_forward.1} parent=103 // pred_check_branch
          %931 = sbr.rel (%p929) target = $region152
        $region151: #{textnet_forward.1} parent=103 // pred_region
          %933 = dma.done %s925, 32
        $region152: #{textnet_forward.1} parent=103 // pred_fallthru
          _
        // Predicated region
        $region153: #{textnet_forward.1} parent=103 // pred_check
          %p934 = pneg %p501
        $region154: #{textnet_forward.1} parent=103 // pred_check_branch
          %936 = sbr.rel (%p934) target = $region156
        $region155: #{textnet_forward.1} parent=103 // pred_region
          %938 = dma.done [#allocation7], 1024
        $region156: #{textnet_forward.1} parent=103 // pred_fallthru
          _
        // Predicated region
        $region157: #{textnet_forward.1} parent=103 // pred_check
          %p939 = pneg %p522
        $region158: #{textnet_forward.1} parent=103 // pred_check_branch
          %941 = sbr.rel (%p939) target = $region160
        $region159: #{textnet_forward.1} parent=103 // pred_region
          %943 = dma.done [#allocation10], 16
        $region160: #{textnet_forward.1} parent=103 // pred_fallthru
          _
        %p944 = pneg %p52
        %p945 = pneg %p49
        %p946 = pneg %p73
        %p947 = pneg %p70
        %p948 = pneg %p94
        %p949 = pneg %p91
        %p950 = pneg %p115
        %p951 = pneg %p112
        %p952 = pneg %p136
        %p953 = pneg %p133
        %p954 = pneg %p157
        %p955 = pneg %p154
        %p956 = pneg %p178
        %p957 = pneg %p175
        %p958 = pneg %p199
        %p959 = pneg %p196
        %p960 = pneg %p220
        %p961 = pneg %p217
        %s962 = sand.u32 %s36, 1
        %s963 = scalar_lea.sflag [#allocation4], %s962
        %s964 = sand.u32 %s233, 1
        %s965 = smul.addr %s964, 192
        %s966 = scalar_lea.vmem [#allocation11], %s965
        %p967 = pneg %p246
        %p968 = pneg %p243
        %p969 = scmp.lt.s32.totalorder %s36, 1
        %s970 = scalar_select %p969, %s36, 1
        %s971 = smul.addr %s970, 3
        %s972 = scalar_lea.vmem %s10, %s971
        %p973 = pneg %p272
        %p974 = pneg %p269
        %s975 = sand.u32 %s36, 1
        %s976 = scalar_lea.sflag [#allocation4], %s975
        %s977 = sand.u32 %s285, 1
        %s978 = smul.addr %s977, 64
        %s979 = scalar_lea.vmem [#allocation12], %s978
        %p980 = pneg %p298
        %p981 = pneg %p295
        %s982 = sand.u32 %s36, 1
        %s983 = scalar_lea.sflag [#allocation4], %s982
        %s984 = sand.u32 %s311, 1
        %s985 = scalar_lea.vmem [#allocation13], %s984
        %p986 = pneg %p324
        %p987 = pneg %p321
        %p988 = scmp.lt.s32.totalorder %s36, 1
        %s989 = scalar_select %p988, %s36, 1
        %s990 = smul.addr %s989, 2
        %s991 = scalar_lea.vmem %s13, %s990
        %p992 = pneg %p350
        %p993 = pneg %p347
        %s994 = sand.u32 %s36, 1
        %s995 = scalar_lea.sflag [#allocation4], %s994
        %s996 = sand.u32 %s363, 1
        %s997 = smul.addr %s996, 128
        %s998 = scalar_lea.vmem [#allocation14], %s997
        %p999 = pneg %p376
        %p1000 = pneg %p373
        %s1001 = sand.u32 %s36, 1
        %s1002 = scalar_lea.sflag [#allocation4], %s1001
        %s1003 = sand.u32 %s389, 1
        %s1004 = smul.addr %s1003, 2
        %s1005 = scalar_lea.vmem [#allocation15], %s1004
        %p1006 = pneg %p402
        %p1007 = pneg %p399
        %s1008 = sand.u32 %s36, 1
        %s1009 = scalar_lea.sflag [#allocation4], %s1008
        %s1010 = sand.u32 %s415, 1
        %s1011 = smul.addr %s1010, 128
        %s1012 = scalar_lea.vmem [#allocation16], %s1011
        %p1013 = pneg %p428
        %p1014 = pneg %p425
        %s1015 = sand.u32 %s36, 1
        %s1016 = scalar_lea.sflag [#allocation4], %s1015
        %s1017 = sand.u32 %s441, 1
        %s1018 = scalar_lea.vmem [#allocation17], %s1017
        %p1019 = pneg %p454
        %p1020 = pneg %p451
        %s1021 = sand.u32 %s36, 1
        %s1022 = scalar_lea.sflag [#allocation4], %s1021
        %s1023 = sand.u32 %s467, 1
        %s1024 = smul.addr %s1023, 2
        %s1025 = scalar_lea.vmem [#allocation18], %s1024
        %p1026 = pneg %p480
        %p1027 = pneg %p477
        %p1028 = pneg %p501
        %p1029 = pneg %p498
        %p1030 = pneg %p522
        %p1031 = pneg %p519
        %p1032 = pneg %p543
        %p1033 = pneg %p540
        %p1034 = scmp.lt.s32.totalorder %s36, 1
        %s1035 = scalar_select %p1034, %s36, 1
        %s1036 = smul.addr %s1035, 3
        %s1037 = scalar_lea.vmem %s10, %s1036
        %p1038 = scmp.lt.s32.totalorder %s36, 1
        %s1039 = scalar_select %p1038, %s36, 1
        %s1040 = smul.addr %s1039, 2
        %s1041 = scalar_lea.vmem %s13, %s1040
        %p1042 = scmp.eq.s32.totalorder %s36, 0
        // Predicated region
        $region161: #{textnet_forward.1} parent=103 // pred_check
          %p1043 = pneg %p1042
        $region162: #{textnet_forward.1} parent=103 // pred_check_branch
          %1045 = sbr.rel (%p1043) target = $region164
        $region163: #{textnet_forward.1} parent=103 // pred_region
          %v1046 = vld [vmem:[%s0] sm:$0xff]
          %v1047 = vld [vmem:[%s0 + $0x8] sm:$0xff]
          %v1048 = vld [vmem:[%s1] sm:$0xff]
          %v1049 = vld [vmem:[%s1 + $0x8] sm:$0xff]
          %v1050 = vcvt.s32.f32 %v1048
          %v1051 = vcvt.s32.f32 %v1049
          %v1052 = vlaneseq
          %v1053 = vand.u32 %v1052, 127
          %1054 = vset.pattern.permute.xlu0 0
          %1055 = vperm.xlu0 %1054, %v1046
          %v1056 = vpop.permute.xlu0 %1055
          %1057 = vset.pattern.permute.xlu0 0
          %1058 = vperm.xlu0 %1057, %v1047
          %v1059 = vpop.permute.xlu0 %1058
          %vm1060 = vcmp.eq.s32.totalorder %v1056, %v1053
          %vm1061 = vcmp.eq.s32.totalorder %v1059, %v1053
          %v1062 = vsel %vm1060, 1.0, 0.0
          %v1063 = vsel %vm1061, 1.0, 0.0
          %v1064 = vld [vmem:[%s3] sm:$0xff]
          %v1065 = vld [vmem:[%s3 + $0x8] sm:$0xff]
          %v1066 = vld [vmem:[%s3 + $0x10] sm:$0xff]
          %v1067 = vld [vmem:[%s3 + $0x18] sm:$0xff]
          %v1068 = vld [vmem:[%s3 + $0x20] sm:$0xff]
          %v1069 = vld [vmem:[%s3 + $0x28] sm:$0xff]
          %v1070 = vld [vmem:[%s3 + $0x30] sm:$0xff]
          %v1071 = vld [vmem:[%s3 + $0x38] sm:$0xff]
          %v1072 = vld [vmem:[%s3 + $0x40] sm:$0xff]
          %v1073 = vld [vmem:[%s3 + $0x48] sm:$0xff]
          %v1074 = vld [vmem:[%s3 + $0x50] sm:$0xff]
          %v1075 = vld [vmem:[%s3 + $0x58] sm:$0xff]
          %v1076 = vld [vmem:[%s3 + $0x60] sm:$0xff]
          %v1077 = vld [vmem:[%s3 + $0x68] sm:$0xff]
          %v1078 = vld [vmem:[%s3 + $0x70] sm:$0xff]
          %v1079 = vld [vmem:[%s3 + $0x78] sm:$0xff]
          %v1080 = vld [vmem:[#allocation6] sm:$0x3]
          %v1081 = vsub.f32 1.0, %v1050
          %v1082 = vsub.f32 1.0, %v1051
          %v1083 = vperm.slane %v1080, 0
          %1085 = vset.pattern.permute.xlu0 0
          %1086 = vperm.xlu0 %1085, %v1081
          %v1087 = vpop.permute.xlu0 %1086
          %1090 = vset.pattern.permute.xlu0 0
          %1091 = vperm.xlu0 %1090, %v1082
          %v1092 = vpop.permute.xlu0 %1091
          %v1094 = vmul.f32 %v1083, %v1087
          %v1095 = vmul.f32 %v1083, %v1092
          %v1096 = vperm.slane %v1080, 1
          %1098 = vset.pattern.permute.xlu0 0
          %1099 = vperm.xlu0 %1098, %v1050
          %v1100 = vpop.permute.xlu0 %1099
          %1103 = vset.pattern.permute.xlu0 0
          %1104 = vperm.xlu0 %1103, %v1051
          %v1105 = vpop.permute.xlu0 %1104
          %v1107 = vmul.f32 %v1096, %v1100
          %v1108 = vmul.f32 %v1096, %v1105
          %v1109 = vadd.f32 %v1094, %v1107
          %v1110 = vadd.f32 %v1095, %v1108
          %v1111 = vld [vmem:[#allocation3] sm:$0xff]
          %v1112 = vld [vmem:[#allocation3 + $0x8] sm:$0xff]
          %1113 = vmatpush.msra.mxu0 %v1079
          %1114 = vmatpush.msra.mxu0 %v1078
          %1115 = vmatpush.msra.mxu0 %v1077
          %1116 = vmatpush.msra.mxu0 %v1076
          %1117 = vmatpush.msra.mxu0 %v1075
          %1118 = vmatpush.msra.mxu0 %v1074
          %1119 = vmatpush.msra.mxu0 %v1073
          %1120 = vmatpush.msra.mxu0 %v1072
          %1121 = vmatpush.msra.mxu0 %v1071
          %1122 = vmatpush.msra.mxu0 %v1070
          %1123 = vmatpush.msra.mxu0 %v1069
          %1124 = vmatpush.msra.mxu0 %v1068
          %1125 = vmatpush.msra.mxu0 %v1067
          %1126 = vmatpush.msra.mxu0 %v1066
          %1127 = vmatpush.msra.mxu0 %v1065
          %1128 = vmatpush.msra.mxu0 %v1064
          %1129 = vmatmul.f32.gmra.mxu0 %v1062
          %v1130 = vpop.f32.mrf.mxu0
          %v1131 = vadd.f32 %v1111, %v1130
          %1132 = vmatmul.f32.gmra.mxu0 %v1063
          %v1133 = vpop.f32.mrf.mxu0
          %v1134 = vadd.f32 %v1112, %v1133
          %1135 = vdwg.mxu0
          %v1136 = vadd.f32 %v1131, %v1109
          %v1137 = vadd.f32 %v1134, %v1110
          %v1138 = vld [vmem:[#allocation8] sm:$0x3]
          %1139 = vadd.xlane.f32.xlu0 %v1136
          %v1140 = vpop.xlane.xlu0 %1139
          %1141 = vadd.xlane.f32.xlu0 %v1137
          %v1142 = vpop.xlane.xlu0 %1141
          %v1143 = vrcp.pop 128.0
          %v1144 = vmul.f32 128.0, %v1143
          %v1145 = vsub.f32 1.0, %v1144
          %v1146 = vmul.f32 %v1143, %v1145
          %v1147 = vadd.f32 %v1143, %v1146
          %vm1148 = vweird.f32 %v1143
          %v1149 = vsel %vm1148, %v1143, %v1147
          %v1150 = vmul.f32 %v1140, %v1149
          %v1151 = vmul.f32 %v1142, %v1149
          %v1152 = vsub.f32 %v1136, %v1150
          %v1153 = vsub.f32 %v1137, %v1151
          %v1154 = vmul.f32 %v1152, %v1152
          %v1155 = vmul.f32 %v1153, %v1153
          %1156 = vadd.xlane.f32.xlu0 %v1154
          %v1157 = vpop.xlane.xlu0 %1156
          %1158 = vadd.xlane.f32.xlu0 %v1155
          %v1159 = vpop.xlane.xlu0 %1158
          %v1160 = vmul.f32 %v1157, %v1149
          %v1161 = vmul.f32 %v1159, %v1149
          %v1162 = vadd.f32 %v1160, 1e-12
          %v1163 = vadd.f32 %v1161, 1e-12
          %v1164 = vrsqrt.pop %v1162
          %v1165 = vmul.f32 %v1164, %v1162
          %v1166 = vmul.f32 %v1165, %v1164
          %v1167 = vmul.f32 0.5, %v1166
          %v1168 = vsub.f32 1.5, %v1167
          %v1169 = vmul.f32 %v1164, %v1168
          %vm1170 = vweird.f32 %v1162
          %vm1171 = vweird.f32 %v1164
          %vm1172 = vmor %vm1170, %vm1171
          %v1173 = vsel %vm1172, %v1164, %v1169
          %v1174 = vrsqrt.pop %v1163
          %v1175 = vmul.f32 %v1174, %v1163
          %v1176 = vmul.f32 %v1175, %v1174
          %v1177 = vmul.f32 0.5, %v1176
          %v1178 = vsub.f32 1.5, %v1177
          %v1179 = vmul.f32 %v1174, %v1178
          %vm1180 = vweird.f32 %v1163
          %vm1181 = vweird.f32 %v1174
          %vm1182 = vmor %vm1180, %vm1181
          %v1183 = vsel %vm1182, %v1174, %v1179
          %v1184 = vmul.f32 %v1152, %v1173
          %v1185 = vmul.f32 %v1153, %v1183
          %v1186 = vperm.slane %v1138, 0
          %v1187 = vmul.f32 %v1184, %v1186
          %v1188 = vmul.f32 %v1185, %v1186
          %v1189 = vperm.slane %v1138, 1
          %v1190 = vadd.f32 %v1187, %v1189
          %v1191 = vadd.f32 %v1188, %v1189
          %1192 = vst [vmem:[#allocation2] sm:$0xff] %v1190
          %1193 = vst [vmem:[#allocation2 + $0x8] sm:$0xff] %v1191
        $region164: #{textnet_forward.1} parent=103 // pred_fallthru
          _
        %v1194 = vld [vmem:[%s7] sm:$0xff]
        %v1195 = vld [vmem:[%s7 + $0x8] sm:$0xff]
        %v1196 = vld [vmem:[%s7 + $0x10] sm:$0xff]
        %v1197 = vld [vmem:[%s7 + $0x18] sm:$0xff]
        %v1198 = vld [vmem:[%s7 + $0x20] sm:$0xff]
        %v1199 = vld [vmem:[%s7 + $0x28] sm:$0xff]
        %v1200 = vld [vmem:[%s7 + $0x30] sm:$0xff]
        %v1201 = vld [vmem:[%s7 + $0x38] sm:$0xff]
        %v1202 = vld [vmem:[%s2] sm:$0x1]
        %v1203 = vsub.f32 1.0, %v1202
        %v1204 = vmul.f32 %v1203, -1e+09
        %v1206 = vperm.slane %v1204, 0
        %v1208 = vadd.f32 %v1194, %v1206
        %v1209 = vadd.f32 %v1195, %v1206
        %v1210 = vadd.f32 %v1196, %v1206
        %v1211 = vadd.f32 %v1197, %v1206
        %v1212 = vadd.f32 %v1198, %v1206
        %v1213 = vadd.f32 %v1199, %v1206
        %v1214 = vadd.f32 %v1200, %v1206
        %v1215 = vadd.f32 %v1201, %v1206
        %v1216 = vld [vmem:[#allocation9] sm:$0xff]
        %v1217 = vld [vmem:[#allocation9 + $0x8] sm:$0xff]
        %v1218 = vld [vmem:[#allocation9 + $0x10] sm:$0xff]
        %v1219 = vld [vmem:[#allocation9 + $0x18] sm:$0xff]
        %v1220 = vld [vmem:[#allocation9 + $0x20] sm:$0xff]
        %v1221 = vld [vmem:[#allocation9 + $0x28] sm:$0xff]
        %v1222 = vld [vmem:[#allocation9 + $0x30] sm:$0xff]
        %v1223 = vld [vmem:[#allocation9 + $0x38] sm:$0xff]
        %v1224 = vld [vmem:[#allocation2] sm:$0xff]
        %v1225 = vld [vmem:[#allocation2 + $0x8] sm:$0xff]
        %v1226 = vpack.c.bf16 %v1225, %v1224
        %v1227 = vld [vmem:[%s860] sm:$0xff]
        %v1228 = vld [vmem:[%s860 + $0x8] sm:$0xf]
        %v1229 = vld [vmem:[%s860 + $0xc] sm:$0xff]
        %v1230 = vld [vmem:[%s860 + $0x14] sm:$0xf]
        %v1231 = vld [vmem:[%s860 + $0x18] sm:$0xff]
        %v1232 = vld [vmem:[%s860 + $0x20] sm:$0xf]
        %v1233 = vld [vmem:[%s860 + $0x24] sm:$0xff]
        %v1234 = vld [vmem:[%s860 + $0x2c] sm:$0xf]
        %v1235 = vld [vmem:[%s860 + $0x30] sm:$0xff]
        %v1236 = vld [vmem:[%s860 + $0x38] sm:$0xf]
        %v1237 = vld [vmem:[%s860 + $0x3c] sm:$0xff]
        %v1238 = vld [vmem:[%s860 + $0x44] sm:$0xf]
        %v1239 = vld [vmem:[%s860 + $0x48] sm:$0xff]
        %v1240 = vld [vmem:[%s860 + $0x50] sm:$0xf]
        %v1241 = vld [vmem:[%s860 + $0x54] sm:$0xff]
        %v1242 = vld [vmem:[%s860 + $0x5c] sm:$0xf]
        %v1243 = vld [vmem:[%s860 + $0x60] sm:$0xff]
        %v1244 = vld [vmem:[%s860 + $0x68] sm:$0xf]
        %v1245 = vld [vmem:[%s860 + $0x6c] sm:$0xff]
        %v1246 = vld [vmem:[%s860 + $0x74] sm:$0xf]
        %v1247 = vld [vmem:[%s860 + $0x78] sm:$0xff]
        %v1248 = vld [vmem:[%s860 + $0x80] sm:$0xf]
        %v1249 = vld [vmem:[%s860 + $0x84] sm:$0xff]
        %v1250 = vld [vmem:[%s860 + $0x8c] sm:$0xf]
        %v1251 = vld [vmem:[%s860 + $0x90] sm:$0xff]
        %v1252 = vld [vmem:[%s860 + $0x98] sm:$0xf]
        %v1253 = vld [vmem:[%s860 + $0x9c] sm:$0xff]
        %v1254 = vld [vmem:[%s860 + $0xa4] sm:$0xf]
        %v1255 = vld [vmem:[%s860 + $0xa8] sm:$0xff]
        %v1256 = vld [vmem:[%s860 + $0xb0] sm:$0xf]
        %v1257 = vld [vmem:[%s860 + $0xb4] sm:$0xff]
        %v1258 = vld [vmem:[%s860 + $0xbc] sm:$0xf]
        %v1259 = vld [vmem:[%s1037] sm:$0x7]
        %v1261 = vperm.slane %v1259, 0
        %v1262 = vperm.slane %v1259, 1
        %v1263 = vperm.slane %v1259, 2
        %v1299 = vunpack.c.l.b16 %v1227
        %v1300 = vunpack.c.h.b16 %v1227
        %v1301 = vunpack.c.l.b16 %v1228
        %v1302 = vunpack.c.l.b16 %v1229
        %v1303 = vunpack.c.h.b16 %v1229
        %v1304 = vunpack.c.l.b16 %v1230
        %v1305 = vunpack.c.l.b16 %v1231
        %v1306 = vunpack.c.h.b16 %v1231
        %v1307 = vunpack.c.l.b16 %v1232
        %v1308 = vunpack.c.l.b16 %v1233
        %v1309 = vunpack.c.h.b16 %v1233
        %v1310 = vunpack.c.l.b16 %v1234
        %v1311 = vunpack.c.l.b16 %v1235
        %v1312 = vunpack.c.h.b16 %v1235
        %v1313 = vunpack.c.l.b16 %v1236
        %v1314 = vunpack.c.l.b16 %v1237
        %v1315 = vunpack.c.h.b16 %v1237
        %v1316 = vunpack.c.l.b16 %v1238
        %v1317 = vunpack.c.l.b16 %v1239
        %v1318 = vunpack.c.h.b16 %v1239
        %v1319 = vunpack.c.l.b16 %v1240
        %v1320 = vunpack.c.l.b16 %v1241
        %v1321 = vunpack.c.h.b16 %v1241
        %v1322 = vunpack.c.l.b16 %v1242
        %v1323 = vunpack.c.l.b16 %v1243
        %v1324 = vunpack.c.h.b16 %v1243
        %v1325 = vunpack.c.l.b16 %v1244
        %v1326 = vunpack.c.l.b16 %v1245
        %v1327 = vunpack.c.h.b16 %v1245
        %v1328 = vunpack.c.l.b16 %v1246
        %v1329 = vunpack.c.l.b16 %v1247
        %v1330 = vunpack.c.h.b16 %v1247
        %v1331 = vunpack.c.l.b16 %v1248
        %v1332 = vunpack.c.l.b16 %v1249
        %v1333 = vunpack.c.h.b16 %v1249
        %v1334 = vunpack.c.l.b16 %v1250
        %v1335 = vunpack.c.l.b16 %v1251
        %v1336 = vunpack.c.h.b16 %v1251
        %v1337 = vunpack.c.l.b16 %v1252
        %v1338 = vunpack.c.l.b16 %v1253
        %v1339 = vunpack.c.h.b16 %v1253
        %v1340 = vunpack.c.l.b16 %v1254
        %v1341 = vunpack.c.l.b16 %v1255
        %v1342 = vunpack.c.h.b16 %v1255
        %v1343 = vunpack.c.l.b16 %v1256
        %v1344 = vunpack.c.l.b16 %v1257
        %v1345 = vunpack.c.h.b16 %v1257
        %v1346 = vunpack.c.l.b16 %v1258
        %v1347 = vpack.c.b16 %v1302, %v1299
        %v1348 = vpack.c.b16 %v1303, %v1300
        %v1349 = vpack.c.b16 %v1304, %v1301
        %v1350 = vpack.c.b16 %v1308, %v1305
        %v1351 = vpack.c.b16 %v1309, %v1306
        %v1352 = vpack.c.b16 %v1310, %v1307
        %v1353 = vpack.c.b16 %v1314, %v1311
        %v1354 = vpack.c.b16 %v1315, %v1312
        %v1355 = vpack.c.b16 %v1316, %v1313
        %v1356 = vpack.c.b16 %v1320, %v1317
        %v1357 = vpack.c.b16 %v1321, %v1318
        %v1358 = vpack.c.b16 %v1322, %v1319
        %v1359 = vpack.c.b16 %v1326, %v1323
        %v1360 = vpack.c.b16 %v1327, %v1324
        %v1361 = vpack.c.b16 %v1328, %v1325
        %v1362 = vpack.c.b16 %v1332, %v1329
        %v1363 = vpack.c.b16 %v1333, %v1330
        %v1364 = vpack.c.b16 %v1334, %v1331
        %v1365 = vpack.c.b16 %v1338, %v1335
        %v1366 = vpack.c.b16 %v1339, %v1336
        %v1367 = vpack.c.b16 %v1340, %v1337
        %v1368 = vpack.c.b16 %v1344, %v1341
        %v1369 = vpack.c.b16 %v1345, %v1342
        %v1370 = vpack.c.b16 %v1346, %v1343
        %1395 = vmatpush.bf16.msra.mxu0 %v1368
        %1396 = vmatpush.bf16.msra.mxu0 %v1365
        %1397 = vmatpush.bf16.msra.mxu0 %v1362
        %1398 = vmatpush.bf16.msra.mxu0 %v1359
        %1399 = vmatpush.bf16.msra.mxu0 %v1356
        %1400 = vmatpush.bf16.msra.mxu0 %v1353
        %1401 = vmatpush.bf16.msra.mxu0 %v1350
        %1402 = vmatpush.bf16.msra.mxu0 %v1347
        %1403 = vmatmul.bf16.gmra.mxu0 %v1226
        %v1404 = vpop.f32.mrf.mxu0
        %v1405 = vadd.f32 %v1261, %v1404
        %v1406 = vpop.f32.mrf.mxu0
        %v1407 = vadd.f32 %v1261, %v1406
        %1408 = vdwg.mxu0
        %1409 = vmatpush.bf16.msra.mxu0 %v1369
        %1410 = vmatpush.bf16.msra.mxu0 %v1366
        %1411 = vmatpush.bf16.msra.mxu0 %v1363
        %1412 = vmatpush.bf16.msra.mxu0 %v1360
        %1413 = vmatpush.bf16.msra.mxu0 %v1357
        %1414 = vmatpush.bf16.msra.mxu0 %v1354
        %1415 = vmatpush.bf16.msra.mxu0 %v1351
        %1416 = vmatpush.bf16.msra.mxu0 %v1348
        %1417 = vmatmul.bf16.gmra.mxu0 %v1226
        %v1418 = vpop.f32.mrf.mxu0
        %v1419 = vadd.f32 %v1262, %v1418
        %v1420 = vpop.f32.mrf.mxu0
        %v1421 = vadd.f32 %v1262, %v1420
        %1422 = vdwg.mxu0
        %1423 = vmatpush.bf16.msra.mxu0 %v1370
        %1424 = vmatpush.bf16.msra.mxu0 %v1367
        %1425 = vmatpush.bf16.msra.mxu0 %v1364
        %1426 = vmatpush.bf16.msra.mxu0 %v1361
        %1427 = vmatpush.bf16.msra.mxu0 %v1358
        %1428 = vmatpush.bf16.msra.mxu0 %v1355
        %1429 = vmatpush.bf16.msra.mxu0 %v1352
        %1430 = vmatpush.bf16.msra.mxu0 %v1349
        %1431 = vmatmul.bf16.gmra.mxu0 %v1226
        %v1432 = vpop.f32.mrf.mxu0
        %v1433 = vadd.f32 %v1263, %v1432
        %v1434 = vpop.f32.mrf.mxu0
        %v1435 = vadd.f32 %v1263, %v1434
        %1436 = vdwg.mxu0
        %v1437 = vmul.f32 %v1405, %v1216
        %v1438 = vmul.f32 %v1407, %v1217
        %v1439 = vmul.f32 %v1405, %v1218
        %v1440 = vmul.f32 %v1407, %v1219
        %v1441 = vmul.f32 %v1405, %v1220
        %v1442 = vmul.f32 %v1407, %v1221
        %v1443 = vmul.f32 %v1405, %v1222
        %v1444 = vmul.f32 %v1407, %v1223
        %1445 = vmatpush.xpose.msra.mxu0 0.0
        %1446 = vmatpush.xpose.msra.mxu0 0.0
        %1447 = vmatpush.xpose.msra.mxu0 0.0
        %1448 = vmatpush.xpose.msra.mxu0 0.0
        %1449 = vmatpush.xpose.msra.mxu0 0.0
        %1450 = vmatpush.xpose.msra.mxu0 0.0
        %1451 = vmatpush.xpose.msra.mxu0 0.0
        %1452 = vmatpush.xpose.msra.mxu0 0.0
        %1453 = vmatpush.xpose.msra.mxu0 0.0
        %1454 = vmatpush.xpose.msra.mxu0 0.0
        %1455 = vmatpush.xpose.msra.mxu0 0.0
        %1456 = vmatpush.xpose.msra.mxu0 0.0
        %1457 = vmatpush.xpose.msra.mxu0 0.0
        %1458 = vmatpush.xpose.msra.mxu0 0.0
        %1459 = vmatpush.xpose.msra.mxu0 %v1421
        %1460 = vmatpush.xpose.msra.mxu0 %v1419
        %1461 = vmatmul.f32.gmra.mxu0 %v1437
        %v1462 = vpop.f32.mrf.mxu0
        %v1463 = vadd.f32 0.0, %v1462
        %1464 = vmatmul.f32.gmra.mxu0 %v1438
        %v1465 = vpop.f32.mrf.mxu0
        %v1466 = vadd.f32 0.0, %v1465
        %1467 = vmatmul.f32.gmra.mxu0 %v1439
        %v1468 = vpop.f32.mrf.mxu0
        %v1469 = vadd.f32 0.0, %v1468
        %1470 = vmatmul.f32.gmra.mxu0 %v1440
        %v1471 = vpop.f32.mrf.mxu0
        %v1472 = vadd.f32 0.0, %v1471
        %1473 = vmatmul.f32.gmra.mxu0 %v1441
        %v1474 = vpop.f32.mrf.mxu0
        %v1475 = vadd.f32 0.0, %v1474
        %1476 = vmatmul.f32.gmra.mxu0 %v1442
        %v1477 = vpop.f32.mrf.mxu0
        %v1478 = vadd.f32 0.0, %v1477
        %1479 = vmatmul.f32.gmra.mxu0 %v1443
        %v1480 = vpop.f32.mrf.mxu0
        %v1481 = vadd.f32 0.0, %v1480
        %1482 = vmatmul.f32.gmra.mxu0 %v1444
        %v1483 = vpop.f32.mrf.mxu0
        %v1484 = vadd.f32 0.0, %v1483
        %1485 = vdwg.mxu0
        %v1486 = vmul.f32 %v1463, 0.17677669
        %v1487 = vmul.f32 %v1466, 0.17677669
        %v1488 = vmul.f32 %v1469, 0.17677669
        %v1489 = vmul.f32 %v1472, 0.17677669
        %v1490 = vmul.f32 %v1475, 0.17677669
        %v1491 = vmul.f32 %v1478, 0.17677669
        %v1492 = vmul.f32 %v1481, 0.17677669
        %v1493 = vmul.f32 %v1484, 0.17677669
        %v1494 = vadd.f32 %v1486, %v1208
        %v1495 = vadd.f32 %v1487, %v1209
        %v1496 = vadd.f32 %v1488, %v1210
        %v1497 = vadd.f32 %v1489, %v1211
        %v1498 = vadd.f32 %v1490, %v1212
        %v1499 = vadd.f32 %v1491, %v1213
        %v1500 = vadd.f32 %v1492, %v1214
        %v1501 = vadd.f32 %v1493, %v1215
        %vm1502 = vcmask 130048
        %v1503 = vsel %vm1502, %v1494, -inf
        %1504 = vmax.xlane.f32.xlu0 %v1503
        %v1505 = vpop.xlane.xlu0 %1504
        %v1506 = vsel %vm1502, %v1495, -inf
        %1507 = vmax.xlane.f32.xlu0 %v1506
        %v1508 = vpop.xlane.xlu0 %1507
        %v1509 = vsel %vm1502, %v1496, -inf
        %1510 = vmax.xlane.f32.xlu0 %v1509
        %v1511 = vpop.xlane.xlu0 %1510
        %v1512 = vsel %vm1502, %v1497, -inf
        %1513 = vmax.xlane.f32.xlu0 %v1512
        %v1514 = vpop.xlane.xlu0 %1513
        %v1515 = vsel %vm1502, %v1498, -inf
        %1516 = vmax.xlane.f32.xlu0 %v1515
        %v1517 = vpop.xlane.xlu0 %1516
        %v1518 = vsel %vm1502, %v1499, -inf
        %1519 = vmax.xlane.f32.xlu0 %v1518
        %v1520 = vpop.xlane.xlu0 %1519
        %v1521 = vsel %vm1502, %v1500, -inf
        %1522 = vmax.xlane.f32.xlu0 %v1521
        %v1523 = vpop.xlane.xlu0 %1522
        %v1524 = vsel %vm1502, %v1501, -inf
        %1525 = vmax.xlane.f32.xlu0 %v1524
        %v1526 = vpop.xlane.xlu0 %1525
        %v1527 = vsub.f32 %v1494, %v1505
        %v1528 = vsub.f32 %v1495, %v1508
        %v1529 = vsub.f32 %v1496, %v1511
        %v1530 = vsub.f32 %v1497, %v1514
        %v1531 = vsub.f32 %v1498, %v1517
        %v1532 = vsub.f32 %v1499, %v1520
        %v1533 = vsub.f32 %v1500, %v1523
        %v1534 = vsub.f32 %v1501, %v1526
        %v1535 = vmul.f32 %v1527, 1.442695
        %v1536 = vpow.pop %v1535
        %v1537 = vmul.f32 %v1528, 1.442695
        %v1538 = vpow.pop %v1537
        %v1539 = vmul.f32 %v1529, 1.442695
        %v1540 = vpow.pop %v1539
        %v1541 = vmul.f32 %v1530, 1.442695
        %v1542 = vpow.pop %v1541
        %v1543 = vmul.f32 %v1531, 1.442695
        %v1544 = vpow.pop %v1543
        %v1545 = vmul.f32 %v1532, 1.442695
        %v1546 = vpow.pop %v1545
        %v1547 = vmul.f32 %v1533, 1.442695
        %v1548 = vpow.pop %v1547
        %v1549 = vmul.f32 %v1534, 1.442695
        %v1550 = vpow.pop %v1549
        %v1551 = vsel %vm1502, %v1536, 0.0
        %1552 = vadd.xlane.f32.xlu0 %v1551
        %v1553 = vpop.xlane.xlu0 %1552
        %v1554 = vsel %vm1502, %v1538, 0.0
        %1555 = vadd.xlane.f32.xlu0 %v1554
        %v1556 = vpop.xlane.xlu0 %1555
        %v1557 = vsel %vm1502, %v1540, 0.0
        %1558 = vadd.xlane.f32.xlu0 %v1557
        %v1559 = vpop.xlane.xlu0 %1558
        %v1560 = vsel %vm1502, %v1542, 0.0
        %1561 = vadd.xlane.f32.xlu0 %v1560
        %v1562 = vpop.xlane.xlu0 %1561
        %v1563 = vsel %vm1502, %v1544, 0.0
        %1564 = vadd.xlane.f32.xlu0 %v1563
        %v1565 = vpop.xlane.xlu0 %1564
        %v1566 = vsel %vm1502, %v1546, 0.0
        %1567 = vadd.xlane.f32.xlu0 %v1566
        %v1568 = vpop.xlane.xlu0 %1567
        %v1569 = vsel %vm1502, %v1548, 0.0
        %1570 = vadd.xlane.f32.xlu0 %v1569
        %v1571 = vpop.xlane.xlu0 %1570
        %v1572 = vsel %vm1502, %v1550, 0.0
        %1573 = vadd.xlane.f32.xlu0 %v1572
        %v1574 = vpop.xlane.xlu0 %1573
        %v1575 = vrcp.pop %v1553
        %v1576 = vmul.f32 %v1553, %v1575
        %v1577 = vsub.f32 1.0, %v1576
        %v1578 = vmul.f32 %v1575, %v1577
        %v1579 = vadd.f32 %v1575, %v1578
        %vm1580 = vweird.f32 %v1553
        %vm1581 = vweird.f32 %v1575
        %vm1582 = vmor %vm1580, %vm1581
        %v1583 = vsel %vm1582, %v1575, %v1579
        %v1584 = vand.u32 2147483647, %v1553
        %vm1585 = vcmp.eq.f32.partialorder %v1584, 8.507059e+37
        %v1586 = vand.u32 %v1553, 2147483648
        %v1587 = vor.u32 1.1754944e-38, %v1586
        %v1588 = vsel %vm1585, %v1587, %v1583
        %v1589 = vmul.f32 %v1536, %v1588
        %v1590 = vrcp.pop %v1556
        %v1591 = vmul.f32 %v1556, %v1590
        %v1592 = vsub.f32 1.0, %v1591
        %v1593 = vmul.f32 %v1590, %v1592
        %v1594 = vadd.f32 %v1590, %v1593
        %vm1595 = vweird.f32 %v1556
        %vm1596 = vweird.f32 %v1590
        %vm1597 = vmor %vm1595, %vm1596
        %v1598 = vsel %vm1597, %v1590, %v1594
        %v1599 = vand.u32 2147483647, %v1556
        %vm1600 = vcmp.eq.f32.partialorder %v1599, 8.507059e+37
        %v1601 = vand.u32 %v1556, 2147483648
        %v1602 = vor.u32 1.1754944e-38, %v1601
        %v1603 = vsel %vm1600, %v1602, %v1598
        %v1604 = vmul.f32 %v1538, %v1603
        %v1605 = vrcp.pop %v1559
        %v1606 = vmul.f32 %v1559, %v1605
        %v1607 = vsub.f32 1.0, %v1606
        %v1608 = vmul.f32 %v1605, %v1607
        %v1609 = vadd.f32 %v1605, %v1608
        %vm1610 = vweird.f32 %v1559
        %vm1611 = vweird.f32 %v1605
        %vm1612 = vmor %vm1610, %vm1611
        %v1613 = vsel %vm1612, %v1605, %v1609
        %v1614 = vand.u32 2147483647, %v1559
        %vm1615 = vcmp.eq.f32.partialorder %v1614, 8.507059e+37
        %v1616 = vand.u32 %v1559, 2147483648
        %v1617 = vor.u32 1.1754944e-38, %v1616
        %v1618 = vsel %vm1615, %v1617, %v1613
        %v1619 = vmul.f32 %v1540, %v1618
        %v1620 = vrcp.pop %v1562
        %v1621 = vmul.f32 %v1562, %v1620
        %v1622 = vsub.f32 1.0, %v1621
        %v1623 = vmul.f32 %v1620, %v1622
        %v1624 = vadd.f32 %v1620, %v1623
        %vm1625 = vweird.f32 %v1562
        %vm1626 = vweird.f32 %v1620
        %vm1627 = vmor %vm1625, %vm1626
        %v1628 = vsel %vm1627, %v1620, %v1624
        %v1629 = vand.u32 2147483647, %v1562
        %vm1630 = vcmp.eq.f32.partialorder %v1629, 8.507059e+37
        %v1631 = vand.u32 %v1562, 2147483648
        %v1632 = vor.u32 1.1754944e-38, %v1631
        %v1633 = vsel %vm1630, %v1632, %v1628
        %v1634 = vmul.f32 %v1542, %v1633
        %v1635 = vrcp.pop %v1565
        %v1636 = vmul.f32 %v1565, %v1635
        %v1637 = vsub.f32 1.0, %v1636
        %v1638 = vmul.f32 %v1635, %v1637
        %v1639 = vadd.f32 %v1635, %v1638
        %vm1640 = vweird.f32 %v1565
        %vm1641 = vweird.f32 %v1635
        %vm1642 = vmor %vm1640, %vm1641
        %v1643 = vsel %vm1642, %v1635, %v1639
        %v1644 = vand.u32 2147483647, %v1565
        %vm1645 = vcmp.eq.f32.partialorder %v1644, 8.507059e+37
        %v1646 = vand.u32 %v1565, 2147483648
        %v1647 = vor.u32 1.1754944e-38, %v1646
        %v1648 = vsel %vm1645, %v1647, %v1643
        %v1649 = vmul.f32 %v1544, %v1648
        %v1650 = vrcp.pop %v1568
        %v1651 = vmul.f32 %v1568, %v1650
        %v1652 = vsub.f32 1.0, %v1651
        %v1653 = vmul.f32 %v1650, %v1652
        %v1654 = vadd.f32 %v1650, %v1653
        %vm1655 = vweird.f32 %v1568
        %vm1656 = vweird.f32 %v1650
        %vm1657 = vmor %vm1655, %vm1656
        %v1658 = vsel %vm1657, %v1650, %v1654
        %v1659 = vand.u32 2147483647, %v1568
        %vm1660 = vcmp.eq.f32.partialorder %v1659, 8.507059e+37
        %v1661 = vand.u32 %v1568, 2147483648
        %v1662 = vor.u32 1.1754944e-38, %v1661
        %v1663 = vsel %vm1660, %v1662, %v1658
        %v1664 = vmul.f32 %v1546, %v1663
        %v1665 = vrcp.pop %v1571
        %v1666 = vmul.f32 %v1571, %v1665
        %v1667 = vsub.f32 1.0, %v1666
        %v1668 = vmul.f32 %v1665, %v1667
        %v1669 = vadd.f32 %v1665, %v1668
        %vm1670 = vweird.f32 %v1571
        %vm1671 = vweird.f32 %v1665
        %vm1672 = vmor %vm1670, %vm1671
        %v1673 = vsel %vm1672, %v1665, %v1669
        %v1674 = vand.u32 2147483647, %v1571
        %vm1675 = vcmp.eq.f32.partialorder %v1674, 8.507059e+37
        %v1676 = vand.u32 %v1571, 2147483648
        %v1677 = vor.u32 1.1754944e-38, %v1676
        %v1678 = vsel %vm1675, %v1677, %v1673
        %v1679 = vmul.f32 %v1548, %v1678
        %v1680 = vrcp.pop %v1574
        %v1681 = vmul.f32 %v1574, %v1680
        %v1682 = vsub.f32 1.0, %v1681
        %v1683 = vmul.f32 %v1680, %v1682
        %v1684 = vadd.f32 %v1680, %v1683
        %vm1685 = vweird.f32 %v1574
        %vm1686 = vweird.f32 %v1680
        %vm1687 = vmor %vm1685, %vm1686
        %v1688 = vsel %vm1687, %v1680, %v1684
        %v1689 = vand.u32 2147483647, %v1574
        %vm1690 = vcmp.eq.f32.partialorder %v1689, 8.507059e+37
        %v1691 = vand.u32 %v1574, 2147483648
        %v1692 = vor.u32 1.1754944e-38, %v1691
        %v1693 = vsel %vm1690, %v1692, %v1688
        %v1694 = vmul.f32 %v1550, %v1693
        %v1696 = vsel %vm1502, %v1589, 0
        %v1699 = vsel %vm1502, %v1604, 0
        %v1702 = vsel %vm1502, %v1619, 0
        %v1705 = vsel %vm1502, %v1634, 0
        %v1708 = vsel %vm1502, %v1649, 0
        %v1711 = vsel %vm1502, %v1664, 0
        %v1714 = vsel %vm1502, %v1679, 0
        %v1717 = vsel %vm1502, %v1694, 0
        %1719 = vmatpush.msra.mxu0 0.0
        %1720 = vmatpush.msra.mxu0 0.0
        %1721 = vmatpush.msra.mxu0 0.0
        %1722 = vmatpush.msra.mxu0 0.0
        %1723 = vmatpush.msra.mxu0 0.0
        %1724 = vmatpush.msra.mxu0 0.0
        %1725 = vmatpush.msra.mxu0 0.0
        %1726 = vmatpush.msra.mxu0 0.0
        %1727 = vmatpush.msra.mxu0 0.0
        %1728 = vmatpush.msra.mxu0 0.0
        %1729 = vmatpush.msra.mxu0 0.0
        %1730 = vmatpush.msra.mxu0 0.0
        %1731 = vmatpush.msra.mxu0 0.0
        %1732 = vmatpush.msra.mxu0 0.0
        %1733 = vmatpush.msra.mxu0 %v1435
        %1734 = vmatpush.msra.mxu0 %v1433
        %1735 = vmatmul.f32.gmra.mxu0 %v1696
        %v1736 = vpop.f32.mrf.mxu0
        %v1737 = vadd.f32 0.0, %v1736
        %1738 = vmatmul.f32.gmra.mxu0 %v1699
        %v1739 = vpop.f32.mrf.mxu0
        %v1740 = vadd.f32 0.0, %v1739
        %1741 = vmatmul.f32.gmra.mxu0 %v1702
        %v1742 = vpop.f32.mrf.mxu0
        %v1743 = vadd.f32 0.0, %v1742
        %1744 = vmatmul.f32.gmra.mxu0 %v1705
        %v1745 = vpop.f32.mrf.mxu0
        %v1746 = vadd.f32 0.0, %v1745
        %1747 = vmatmul.f32.gmra.mxu0 %v1708
        %v1748 = vpop.f32.mrf.mxu0
        %v1749 = vadd.f32 0.0, %v1748
        %1750 = vmatmul.f32.gmra.mxu0 %v1711
        %v1751 = vpop.f32.mrf.mxu0
        %v1752 = vadd.f32 0.0, %v1751
        %1753 = vmatmul.f32.gmra.mxu0 %v1714
        %v1754 = vpop.f32.mrf.mxu0
        %v1755 = vadd.f32 0.0, %v1754
        %1756 = vmatmul.f32.gmra.mxu0 %v1717
        %v1757 = vpop.f32.mrf.mxu0
        %v1758 = vadd.f32 0.0, %v1757
        %1759 = vdwg.mxu0
        %v1760 = vmul.f32 %v1737, %v1216
        %v1761 = vmul.f32 %v1740, %v1217
        %v1762 = vmul.f32 %v1743, %v1218
        %v1763 = vmul.f32 %v1746, %v1219
        %v1764 = vmul.f32 %v1749, %v1220
        %v1765 = vmul.f32 %v1752, %v1221
        %v1766 = vmul.f32 %v1755, %v1222
        %v1767 = vmul.f32 %v1758, %v1223
        %v1768 = vadd.f32 %v1760, %v1762
        %v1769 = vadd.f32 %v1761, %v1763
        %v1770 = vadd.f32 %v1768, %v1764
        %v1771 = vadd.f32 %v1769, %v1765
        %v1772 = vadd.f32 %v1770, %v1766
        %v1773 = vadd.f32 %v1771, %v1767
        %v1774 = vpack.c.bf16 %v1773, %v1772
        %v1775 = vld [vmem:[%s870] sm:$0xf]
        %v1776 = vld [vmem:[%s870 + $0x4] sm:$0xf]
        %v1777 = vld [vmem:[%s870 + $0x8] sm:$0xf]
        %v1778 = vld [vmem:[%s870 + $0xc] sm:$0xf]
        %v1779 = vld [vmem:[%s870 + $0x10] sm:$0xf]
        %v1780 = vld [vmem:[%s870 + $0x14] sm:$0xf]
        %v1781 = vld [vmem:[%s870 + $0x18] sm:$0xf]
        %v1782 = vld [vmem:[%s870 + $0x1c] sm:$0xf]
        %v1783 = vld [vmem:[%s870 + $0x20] sm:$0xf]
        %v1784 = vld [vmem:[%s870 + $0x24] sm:$0xf]
        %v1785 = vld [vmem:[%s870 + $0x28] sm:$0xf]
        %v1786 = vld [vmem:[%s870 + $0x2c] sm:$0xf]
        %v1787 = vld [vmem:[%s870 + $0x30] sm:$0xf]
        %v1788 = vld [vmem:[%s870 + $0x34] sm:$0xf]
        %v1789 = vld [vmem:[%s870 + $0x38] sm:$0xf]
        %v1790 = vld [vmem:[%s870 + $0x3c] sm:$0xf]
        %v1791 = vld [vmem:[%s879] sm:$0x1]
        %v1793 = vperm.slane %v1791, 0
        %v1811 = vunpack.c.l.b16 %v1775
        %v1812 = vunpack.c.l.b16 %v1776
        %v1813 = vunpack.c.l.b16 %v1777
        %v1814 = vunpack.c.l.b16 %v1778
        %v1815 = vunpack.c.l.b16 %v1779
        %v1816 = vunpack.c.l.b16 %v1780
        %v1817 = vunpack.c.l.b16 %v1781
        %v1818 = vunpack.c.l.b16 %v1782
        %v1819 = vunpack.c.l.b16 %v1783
        %v1820 = vunpack.c.l.b16 %v1784
        %v1821 = vunpack.c.l.b16 %v1785
        %v1822 = vunpack.c.l.b16 %v1786
        %v1823 = vunpack.c.l.b16 %v1787
        %v1824 = vunpack.c.l.b16 %v1788
        %v1825 = vunpack.c.l.b16 %v1789
        %v1826 = vunpack.c.l.b16 %v1790
        %v1827 = vpack.c.b16 %v1812, %v1811
        %v1828 = vpack.c.b16 %v1814, %v1813
        %v1829 = vpack.c.b16 %v1816, %v1815
        %v1830 = vpack.c.b16 %v1818, %v1817
        %v1831 = vpack.c.b16 %v1820, %v1819
        %v1832 = vpack.c.b16 %v1822, %v1821
        %v1833 = vpack.c.b16 %v1824, %v1823
        %v1834 = vpack.c.b16 %v1826, %v1825
        %1843 = vmatpush.bf16.msra.mxu0 %v1834
        %1844 = vmatpush.bf16.msra.mxu0 %v1833
        %1845 = vmatpush.bf16.msra.mxu0 %v1832
        %1846 = vmatpush.bf16.msra.mxu0 %v1831
        %1847 = vmatpush.bf16.msra.mxu0 %v1830
        %1848 = vmatpush.bf16.msra.mxu0 %v1829
        %1849 = vmatpush.bf16.msra.mxu0 %v1828
        %1850 = vmatpush.bf16.msra.mxu0 %v1827
        %1851 = vmatmul.bf16.gmra.mxu0 %v1774
        %v1852 = vpop.f32.mrf.mxu0
        %v1853 = vadd.f32 %v1793, %v1852
        %v1854 = vpop.f32.mrf.mxu0
        %v1855 = vadd.f32 %v1793, %v1854
        %1856 = vdwg.mxu0
        %v1857 = vadd.f32 %v1224, %v1853
        %v1858 = vadd.f32 %v1225, %v1855
        %v1859 = vld [vmem:[%s1041] sm:$0x3]
        %1860 = vadd.xlane.f32.xlu0 %v1857
        %v1861 = vpop.xlane.xlu0 %1860
        %1862 = vadd.xlane.f32.xlu0 %v1858
        %v1863 = vpop.xlane.xlu0 %1862
        %v1864 = vrcp.pop 128.0
        %v1865 = vmul.f32 128.0, %v1864
        %v1866 = vsub.f32 1.0, %v1865
        %v1867 = vmul.f32 %v1864, %v1866
        %v1868 = vadd.f32 %v1864, %v1867
        %vm1869 = vweird.f32 %v1864
        %v1870 = vsel %vm1869, %v1864, %v1868
        %v1871 = vmul.f32 %v1861, %v1870
        %v1872 = vmul.f32 %v1863, %v1870
        %v1873 = vsub.f32 %v1857, %v1871
        %v1874 = vsub.f32 %v1858, %v1872
        %v1875 = vmul.f32 %v1873, %v1873
        %v1876 = vmul.f32 %v1874, %v1874
        %1877 = vadd.xlane.f32.xlu0 %v1875
        %v1878 = vpop.xlane.xlu0 %1877
        %1879 = vadd.xlane.f32.xlu0 %v1876
        %v1880 = vpop.xlane.xlu0 %1879
        %v1881 = vmul.f32 %v1878, %v1870
        %v1882 = vmul.f32 %v1880, %v1870
        %v1883 = vadd.f32 %v1881, 1e-12
        %v1884 = vadd.f32 %v1882, 1e-12
        %v1885 = vrsqrt.pop %v1883
        %v1886 = vmul.f32 %v1885, %v1883
        %v1887 = vmul.f32 %v1886, %v1885
        %v1888 = vmul.f32 0.5, %v1887
        %v1889 = vsub.f32 1.5, %v1888
        %v1890 = vmul.f32 %v1885, %v1889
        %vm1891 = vweird.f32 %v1883
        %vm1892 = vweird.f32 %v1885
        %vm1893 = vmor %vm1891, %vm1892
        %v1894 = vsel %vm1893, %v1885, %v1890
        %v1895 = vrsqrt.pop %v1884
        %v1896 = vmul.f32 %v1895, %v1884
        %v1897 = vmul.f32 %v1896, %v1895
        %v1898 = vmul.f32 0.5, %v1897
        %v1899 = vsub.f32 1.5, %v1898
        %v1900 = vmul.f32 %v1895, %v1899
        %vm1901 = vweird.f32 %v1884
        %vm1902 = vweird.f32 %v1895
        %vm1903 = vmor %vm1901, %vm1902
        %v1904 = vsel %vm1903, %v1895, %v1900
        %v1905 = vmul.f32 %v1873, %v1894
        %v1906 = vmul.f32 %v1874, %v1904
        %v1907 = vperm.slane %v1859, 0
        %v1908 = vmul.f32 %v1905, %v1907
        %v1909 = vmul.f32 %v1906, %v1907
        %v1910 = vperm.slane %v1859, 1
        %v1911 = vadd.f32 %v1908, %v1910
        %v1912 = vadd.f32 %v1909, %v1910
        %v1913 = vpack.c.bf16 %v1912, %v1911
        %v1914 = vld [vmem:[%s889] sm:$0xff]
        %v1915 = vld [vmem:[%s889 + $0x8] sm:$0xff]
        %v1916 = vld [vmem:[%s889 + $0x10] sm:$0xff]
        %v1917 = vld [vmem:[%s889 + $0x18] sm:$0xff]
        %v1918 = vld [vmem:[%s889 + $0x20] sm:$0xff]
        %v1919 = vld [vmem:[%s889 + $0x28] sm:$0xff]
        %v1920 = vld [vmem:[%s889 + $0x30] sm:$0xff]
        %v1921 = vld [vmem:[%s889 + $0x38] sm:$0xff]
        %v1922 = vld [vmem:[%s889 + $0x40] sm:$0xff]
        %v1923 = vld [vmem:[%s889 + $0x48] sm:$0xff]
        %v1924 = vld [vmem:[%s889 + $0x50] sm:$0xff]
        %v1925 = vld [vmem:[%s889 + $0x58] sm:$0xff]
        %v1926 = vld [vmem:[%s889 + $0x60] sm:$0xff]
        %v1927 = vld [vmem:[%s889 + $0x68] sm:$0xff]
        %v1928 = vld [vmem:[%s889 + $0x70] sm:$0xff]
        %v1929 = vld [vmem:[%s889 + $0x78] sm:$0xff]
        %v1930 = vld [vmem:[%s899] sm:$0x3]
        %v1932 = vperm.slane %v1930, 0
        %v1933 = vperm.slane %v1930, 1
        %v1952 = vunpack.c.l.b16 %v1914
        %v1953 = vunpack.c.h.b16 %v1914
        %v1954 = vunpack.c.l.b16 %v1915
        %v1955 = vunpack.c.h.b16 %v1915
        %v1956 = vunpack.c.l.b16 %v1916
        %v1957 = vunpack.c.h.b16 %v1916
        %v1958 = vunpack.c.l.b16 %v1917
        %v1959 = vunpack.c.h.b16 %v1917
        %v1960 = vunpack.c.l.b16 %v1918
        %v1961 = vunpack.c.h.b16 %v1918
        %v1962 = vunpack.c.l.b16 %v1919
        %v1963 = vunpack.c.h.b16 %v1919
        %v1964 = vunpack.c.l.b16 %v1920
        %v1965 = vunpack.c.h.b16 %v1920
        %v1966 = vunpack.c.l.b16 %v1921
        %v1967 = vunpack.c.h.b16 %v1921
        %v1968 = vunpack.c.l.b16 %v1922
        %v1969 = vunpack.c.h.b16 %v1922
        %v1970 = vunpack.c.l.b16 %v1923
        %v1971 = vunpack.c.h.b16 %v1923
        %v1972 = vunpack.c.l.b16 %v1924
        %v1973 = vunpack.c.h.b16 %v1924
        %v1974 = vunpack.c.l.b16 %v1925
        %v1975 = vunpack.c.h.b16 %v1925
        %v1976 = vunpack.c.l.b16 %v1926
        %v1977 = vunpack.c.h.b16 %v1926
        %v1978 = vunpack.c.l.b16 %v1927
        %v1979 = vunpack.c.h.b16 %v1927
        %v1980 = vunpack.c.l.b16 %v1928
        %v1981 = vunpack.c.h.b16 %v1928
        %v1982 = vunpack.c.l.b16 %v1929
        %v1983 = vunpack.c.h.b16 %v1929
        %v1984 = vpack.c.b16 %v1954, %v1952
        %v1985 = vpack.c.b16 %v1955, %v1953
        %v1986 = vpack.c.b16 %v1958, %v1956
        %v1987 = vpack.c.b16 %v1959, %v1957
        %v1988 = vpack.c.b16 %v1962, %v1960
        %v1989 = vpack.c.b16 %v1963, %v1961
        %v1990 = vpack.c.b16 %v1966, %v1964
        %v1991 = vpack.c.b16 %v1967, %v1965
        %v1992 = vpack.c.b16 %v1970, %v1968
        %v1993 = vpack.c.b16 %v1971, %v1969
        %v1994 = vpack.c.b16 %v1974, %v1972
        %v1995 = vpack.c.b16 %v1975, %v1973
        %v1996 = vpack.c.b16 %v1978, %v1976
        %v1997 = vpack.c.b16 %v1979, %v1977
        %v1998 = vpack.c.b16 %v1982, %v1980
        %v1999 = vpack.c.b16 %v1983, %v1981
        %2016 = vmatpush.bf16.msra.mxu0 %v1998
        %2017 = vmatpush.bf16.msra.mxu0 %v1996
        %2018 = vmatpush.bf16.msra.mxu0 %v1994
        %2019 = vmatpush.bf16.msra.mxu0 %v1992
        %2020 = vmatpush.bf16.msra.mxu0 %v1990
        %2021 = vmatpush.bf16.msra.mxu0 %v1988
        %2022 = vmatpush.bf16.msra.mxu0 %v1986
        %2023 = vmatpush.bf16.msra.mxu0 %v1984
        %2024 = vmatmul.bf16.gmra.mxu0 %v1913
        %v2025 = vpop.f32.mrf.mxu0
        %v2026 = vadd.f32 %v1932, %v2025
        %v2027 = vpop.f32.mrf.mxu0
        %v2028 = vadd.f32 %v1932, %v2027
        %2029 = vdwg.mxu0
        %2030 = vmatpush.bf16.msra.mxu0 %v1999
        %2031 = vmatpush.bf16.msra.mxu0 %v1997
        %2032 = vmatpush.bf16.msra.mxu0 %v1995
        %2033 = vmatpush.bf16.msra.mxu0 %v1993
        %2034 = vmatpush.bf16.msra.mxu0 %v1991
        %2035 = vmatpush.bf16.msra.mxu0 %v1989
        %2036 = vmatpush.bf16.msra.mxu0 %v1987
        %2037 = vmatpush.bf16.msra.mxu0 %v1985
        %2038 = vmatmul.bf16.gmra.mxu0 %v1913
        %v2039 = vpop.f32.mrf.mxu0
        %v2040 = vadd.f32 %v1933, %v2039
        %v2041 = vpop.f32.mrf.mxu0
        %v2042 = vadd.f32 %v1933, %v2041
        %2043 = vdwg.mxu0
        %v2044 = vmul.f32 %v2026, 0.5
        %v2045 = vmul.f32 %v2040, 0.5
        %v2046 = vmul.f32 %v2028, 0.5
        %v2047 = vmul.f32 %v2042, 0.5
        %v2048 = vmul.f32 %v2026, 0.044715
        %v2049 = vmul.f32 %v2040, 0.044715
        %v2050 = vmul.f32 %v2028, 0.044715
        %v2051 = vmul.f32 %v2042, 0.044715
        %v2052 = vmul.f32 %v2048, %v2026
        %v2053 = vmul.f32 %v2049, %v2040
        %v2054 = vmul.f32 %v2050, %v2028
        %v2055 = vmul.f32 %v2051, %v2042
        %v2056 = vmul.f32 %v2052, %v2026
        %v2057 = vmul.f32 %v2053, %v2040
        %v2058 = vmul.f32 %v2054, %v2028
        %v2059 = vmul.f32 %v2055, %v2042
        %v2060 = vadd.f32 %v2026, %v2056
        %v2061 = vadd.f32 %v2040, %v2057
        %v2062 = vadd.f32 %v2028, %v2058
        %v2063 = vadd.f32 %v2042, %v2059
        %v2064 = vmul.f32 %v2060, 0.7978846
        %v2065 = vmul.f32 %v2061, 0.7978846
        %v2066 = vmul.f32 %v2062, 0.7978846
        %v2067 = vmul.f32 %v2063, 0.7978846
        %v2068 = vtanh.pop %v2064
        %v2069 = vtanh.pop %v2065
        %v2070 = vtanh.pop %v2066
        %v2071 = vtanh.pop %v2067
        %v2072 = vadd.f32 %v2068, 1.0
        %v2073 = vadd.f32 %v2069, 1.0
        %v2074 = vadd.f32 %v2070, 1.0
        %v2075 = vadd.f32 %v2071, 1.0
        %v2076 = vmul.f32 %v2044, %v2072
        %v2077 = vmul.f32 %v2045, %v2073
        %v2078 = vmul.f32 %v2046, %v2074
        %v2079 = vmul.f32 %v2047, %v2075
        %v2080 = vpack.c.bf16 %v2078, %v2076
        %v2081 = vpack.c.bf16 %v2079, %v2077
        %v2082 = vld [vmem:[%s909] sm:$0xf]
        %v2083 = vld [vmem:[%s909 + $0x4] sm:$0xf]
        %v2084 = vld [vmem:[%s909 + $0x8] sm:$0xf]
        %v2085 = vld [vmem:[%s909 + $0xc] sm:$0xf]
        %v2086 = vld [vmem:[%s909 + $0x10] sm:$0xf]
        %v2087 = vld [vmem:[%s909 + $0x14] sm:$0xf]
        %v2088 = vld [vmem:[%s909 + $0x18] sm:$0xf]
        %v2089 = vld [vmem:[%s909 + $0x1c] sm:$0xf]
        %v2090 = vld [vmem:[%s909 + $0x20] sm:$0xf]
        %v2091 = vld [vmem:[%s909 + $0x24] sm:$0xf]
        %v2092 = vld [vmem:[%s909 + $0x28] sm:$0xf]
        %v2093 = vld [vmem:[%s909 + $0x2c] sm:$0xf]
        %v2094 = vld [vmem:[%s909 + $0x30] sm:$0xf]
        %v2095 = vld [vmem:[%s909 + $0x34] sm:$0xf]
        %v2096 = vld [vmem:[%s909 + $0x38] sm:$0xf]
        %v2097 = vld [vmem:[%s909 + $0x3c] sm:$0xf]
        %v2098 = vld [vmem:[%s909 + $0x40] sm:$0xf]
        %v2099 = vld [vmem:[%s909 + $0x44] sm:$0xf]
        %v2100 = vld [vmem:[%s909 + $0x48] sm:$0xf]
        %v2101 = vld [vmem:[%s909 + $0x4c] sm:$0xf]
        %v2102 = vld [vmem:[%s909 + $0x50] sm:$0xf]
        %v2103 = vld [vmem:[%s909 + $0x54] sm:$0xf]
        %v2104 = vld [vmem:[%s909 + $0x58] sm:$0xf]
        %v2105 = vld [vmem:[%s909 + $0x5c] sm:$0xf]
        %v2106 = vld [vmem:[%s909 + $0x60] sm:$0xf]
        %v2107 = vld [vmem:[%s909 + $0x64] sm:$0xf]
        %v2108 = vld [vmem:[%s909 + $0x68] sm:$0xf]
        %v2109 = vld [vmem:[%s909 + $0x6c] sm:$0xf]
        %v2110 = vld [vmem:[%s909 + $0x70] sm:$0xf]
        %v2111 = vld [vmem:[%s909 + $0x74] sm:$0xf]
        %v2112 = vld [vmem:[%s909 + $0x78] sm:$0xf]
        %v2113 = vld [vmem:[%s909 + $0x7c] sm:$0xf]
        %v2114 = vld [vmem:[%s918] sm:$0x1]
        %v2116 = vperm.slane %v2114, 0
        %v2150 = vunpack.c.l.b16 %v2082
        %v2151 = vunpack.c.l.b16 %v2083
        %v2152 = vunpack.c.l.b16 %v2084
        %v2153 = vunpack.c.l.b16 %v2085
        %v2154 = vunpack.c.l.b16 %v2086
        %v2155 = vunpack.c.l.b16 %v2087
        %v2156 = vunpack.c.l.b16 %v2088
        %v2157 = vunpack.c.l.b16 %v2089
        %v2158 = vunpack.c.l.b16 %v2090
        %v2159 = vunpack.c.l.b16 %v2091
        %v2160 = vunpack.c.l.b16 %v2092
        %v2161 = vunpack.c.l.b16 %v2093
        %v2162 = vunpack.c.l.b16 %v2094
        %v2163 = vunpack.c.l.b16 %v2095
        %v2164 = vunpack.c.l.b16 %v2096
        %v2165 = vunpack.c.l.b16 %v2097
        %v2166 = vunpack.c.l.b16 %v2098
        %v2167 = vunpack.c.l.b16 %v2099
        %v2168 = vunpack.c.l.b16 %v2100
        %v2169 = vunpack.c.l.b16 %v2101
        %v2170 = vunpack.c.l.b16 %v2102
        %v2171 = vunpack.c.l.b16 %v2103
        %v2172 = vunpack.c.l.b16 %v2104
        %v2173 = vunpack.c.l.b16 %v2105
        %v2174 = vunpack.c.l.b16 %v2106
        %v2175 = vunpack.c.l.b16 %v2107
        %v2176 = vunpack.c.l.b16 %v2108
        %v2177 = vunpack.c.l.b16 %v2109
        %v2178 = vunpack.c.l.b16 %v2110
        %v2179 = vunpack.c.l.b16 %v2111
        %v2180 = vunpack.c.l.b16 %v2112
        %v2181 = vunpack.c.l.b16 %v2113
        %v2182 = vpack.c.b16 %v2151, %v2150
        %v2183 = vpack.c.b16 %v2153, %v2152
        %v2184 = vpack.c.b16 %v2155, %v2154
        %v2185 = vpack.c.b16 %v2157, %v2156
        %v2186 = vpack.c.b16 %v2159, %v2158
        %v2187 = vpack.c.b16 %v2161, %v2160
        %v2188 = vpack.c.b16 %v2163, %v2162
        %v2189 = vpack.c.b16 %v2165, %v2164
        %v2190 = vpack.c.b16 %v2167, %v2166
        %v2191 = vpack.c.b16 %v2169, %v2168
        %v2192 = vpack.c.b16 %v2171, %v2170
        %v2193 = vpack.c.b16 %v2173, %v2172
        %v2194 = vpack.c.b16 %v2175, %v2174
        %v2195 = vpack.c.b16 %v2177, %v2176
        %v2196 = vpack.c.b16 %v2179, %v2178
        %v2197 = vpack.c.b16 %v2181, %v2180
        %2214 = vmatpush.bf16.msra.mxu0 %v2189
        %2215 = vmatpush.bf16.msra.mxu0 %v2188
        %2216 = vmatpush.bf16.msra.mxu0 %v2187
        %2217 = vmatpush.bf16.msra.mxu0 %v2186
        %2218 = vmatpush.bf16.msra.mxu0 %v2185
        %2219 = vmatpush.bf16.msra.mxu0 %v2184
        %2220 = vmatpush.bf16.msra.mxu0 %v2183
        %2221 = vmatpush.bf16.msra.mxu0 %v2182
        %2222 = vmatmul.bf16.gmra.mxu0 %v2080
        %v2223 = vpop.f32.mrf.mxu0
        %v2224 = vadd.f32 %v2116, %v2223
        %v2225 = vpop.f32.mrf.mxu0
        %v2226 = vadd.f32 %v2116, %v2225
        %2227 = vdwg.mxu0
        %2228 = vmatpush.bf16.msra.mxu0 %v2197
        %2229 = vmatpush.bf16.msra.mxu0 %v2196
        %2230 = vmatpush.bf16.msra.mxu0 %v2195
        %2231 = vmatpush.bf16.msra.mxu0 %v2194
        %2232 = vmatpush.bf16.msra.mxu0 %v2193
        %2233 = vmatpush.bf16.msra.mxu0 %v2192
        %2234 = vmatpush.bf16.msra.mxu0 %v2191
        %2235 = vmatpush.bf16.msra.mxu0 %v2190
        %2236 = vmatmul.bf16.gmra.mxu0 %v2081
        %v2237 = vpop.f32.mrf.mxu0
        %v2238 = vadd.f32 %v2224, %v2237
        %v2239 = vpop.f32.mrf.mxu0
        %v2240 = vadd.f32 %v2226, %v2239
        %2241 = vdwg.mxu0
        %v2242 = vadd.f32 %v1911, %v2238
        %v2243 = vadd.f32 %v1912, %v2240
        %v2244 = vld [vmem:[%s928] sm:$0x3]
        %2245 = vadd.xlane.f32.xlu0 %v2242
        %v2246 = vpop.xlane.xlu0 %2245
        %2247 = vadd.xlane.f32.xlu0 %v2243
        %v2248 = vpop.xlane.xlu0 %2247
        %v2249 = vmul.f32 %v2246, %v1870
        %v2250 = vmul.f32 %v2248, %v1870
        %v2251 = vsub.f32 %v2242, %v2249
        %v2252 = vsub.f32 %v2243, %v2250
        %v2253 = vmul.f32 %v2251, %v2251
        %v2254 = vmul.f32 %v2252, %v2252
        %2255 = vadd.xlane.f32.xlu0 %v2253
        %v2256 = vpop.xlane.xlu0 %2255
        %2257 = vadd.xlane.f32.xlu0 %v2254
        %v2258 = vpop.xlane.xlu0 %2257
        %v2259 = vmul.f32 %v2256, %v1870
        %v2260 = vmul.f32 %v2258, %v1870
        %v2261 = vadd.f32 %v2259, 1e-12
        %v2262 = vadd.f32 %v2260, 1e-12
        %v2263 = vrsqrt.pop %v2261
        %v2264 = vmul.f32 %v2263, %v2261
        %v2265 = vmul.f32 %v2264, %v2263
        %v2266 = vmul.f32 0.5, %v2265
        %v2267 = vsub.f32 1.5, %v2266
        %v2268 = vmul.f32 %v2263, %v2267
        %vm2269 = vweird.f32 %v2261
        %vm2270 = vweird.f32 %v2263
        %vm2271 = vmor %vm2269, %vm2270
        %v2272 = vsel %vm2271, %v2263, %v2268
        %v2273 = vrsqrt.pop %v2262
        %v2274 = vmul.f32 %v2273, %v2262
        %v2275 = vmul.f32 %v2274, %v2273
        %v2276 = vmul.f32 0.5, %v2275
        %v2277 = vsub.f32 1.5, %v2276
        %v2278 = vmul.f32 %v2273, %v2277
        %vm2279 = vweird.f32 %v2262
        %vm2280 = vweird.f32 %v2273
        %vm2281 = vmor %vm2279, %vm2280
        %v2282 = vsel %vm2281, %v2273, %v2278
        %v2283 = vmul.f32 %v2251, %v2272
        %v2284 = vmul.f32 %v2252, %v2282
        %v2285 = vperm.slane %v2244, 0
        %v2286 = vmul.f32 %v2283, %v2285
        %v2287 = vmul.f32 %v2284, %v2285
        %v2288 = vperm.slane %v2244, 1
        %v2289 = vadd.f32 %v2286, %v2288
        %v2290 = vadd.f32 %v2287, %v2288
        %2291 = vst [vmem:[#allocation2] sm:$0xff] %v2289
        %2292 = vst [vmem:[#allocation2 + $0x8] sm:$0xff] %v2290
        %p2293 = scmp.eq.s32.totalorder %s36, 1
        // Predicated region
        $region165: #{textnet_forward.1} parent=103 // pred_check
          %p2294 = pneg %p2293
        $region166: #{textnet_forward.1} parent=103 // pred_check_branch
          %2296 = sbr.rel (%p2294) target = $region168
        $region167: #{textnet_forward.1} parent=103 // pred_region
          %v2298 = vrot.slane %v2290, 7
          %vm2300 = vcmask 1040384
          %v2301 = vsel %vm2300, %v2289, %v2298
          %v2302 = vpack.c.bf16 %v2301, %v2301
          %v2303 = vld [vmem:[#allocation19] sm:$0xf]
          %v2304 = vld [vmem:[#allocation19 + $0x4] sm:$0xf]
          %v2305 = vld [vmem:[#allocation19 + $0x8] sm:$0xf]
          %v2306 = vld [vmem:[#allocation19 + $0xc] sm:$0xf]
          %v2307 = vld [vmem:[#allocation19 + $0x10] sm:$0xf]
          %v2308 = vld [vmem:[#allocation19 + $0x14] sm:$0xf]
          %v2309 = vld [vmem:[#allocation19 + $0x18] sm:$0xf]
          %v2310 = vld [vmem:[#allocation19 + $0x1c] sm:$0xf]
          %v2311 = vld [vmem:[#allocation19 + $0x20] sm:$0xf]
          %v2312 = vld [vmem:[#allocation19 + $0x24] sm:$0xf]
          %v2313 = vld [vmem:[#allocation19 + $0x28] sm:$0xf]
          %v2314 = vld [vmem:[#allocation19 + $0x2c] sm:$0xf]
          %v2315 = vld [vmem:[#allocation19 + $0x30] sm:$0xf]
          %v2316 = vld [vmem:[#allocation19 + $0x34] sm:$0xf]
          %v2317 = vld [vmem:[#allocation19 + $0x38] sm:$0xf]
          %v2318 = vld [vmem:[#allocation19 + $0x3c] sm:$0xf]
          %v2319 = vld [vmem:[#allocation20] sm:$0x1]
          %v2321 = vperm.slane %v2319, 0
          %v2339 = vunpack.c.l.b16 %v2303
          %v2340 = vunpack.c.l.b16 %v2304
          %v2341 = vunpack.c.l.b16 %v2305
          %v2342 = vunpack.c.l.b16 %v2306
          %v2343 = vunpack.c.l.b16 %v2307
          %v2344 = vunpack.c.l.b16 %v2308
          %v2345 = vunpack.c.l.b16 %v2309
          %v2346 = vunpack.c.l.b16 %v2310
          %v2347 = vunpack.c.l.b16 %v2311
          %v2348 = vunpack.c.l.b16 %v2312
          %v2349 = vunpack.c.l.b16 %v2313
          %v2350 = vunpack.c.l.b16 %v2314
          %v2351 = vunpack.c.l.b16 %v2315
          %v2352 = vunpack.c.l.b16 %v2316
          %v2353 = vunpack.c.l.b16 %v2317
          %v2354 = vunpack.c.l.b16 %v2318
          %v2355 = vpack.c.b16 %v2340, %v2339
          %v2356 = vpack.c.b16 %v2342, %v2341
          %v2357 = vpack.c.b16 %v2344, %v2343
          %v2358 = vpack.c.b16 %v2346, %v2345
          %v2359 = vpack.c.b16 %v2348, %v2347
          %v2360 = vpack.c.b16 %v2350, %v2349
          %v2361 = vpack.c.b16 %v2352, %v2351
          %v2362 = vpack.c.b16 %v2354, %v2353
          %2371 = vmatpush.bf16.msra.mxu0 %v2362
          %2372 = vmatpush.bf16.msra.mxu0 %v2361
          %2373 = vmatpush.bf16.msra.mxu0 %v2360
          %2374 = vmatpush.bf16.msra.mxu0 %v2359
          %2375 = vmatpush.bf16.msra.mxu0 %v2358
          %2376 = vmatpush.bf16.msra.mxu0 %v2357
          %2377 = vmatpush.bf16.msra.mxu0 %v2356
          %2378 = vmatpush.bf16.msra.mxu0 %v2355
          %2379 = vmatmul.bf16.gmra.mxu0 %v2302
          %v2380 = vpop.f32.mrf.mxu0
          %v2381 = vadd.f32 %v2321, %v2380
          %v2382 = vpop.f32.mrf.mxu0
          %2383 = vdwg.mxu0
          %v2384 = vtanh.pop %v2381
          %2385 = vst [vmem:[#allocation21] sm:$0x3] %v2384
        $region168: #{textnet_forward.1} parent=103 // pred_fallthru
          _
        // Predicated region
        $region169: #{textnet_forward.1} parent=103 // pred_check
          %p2386 = pneg %p540
        $region170: #{textnet_forward.1} parent=103 // pred_check_branch
          %2388 = sbr.rel (%p2386) target = $region172
        $region171: #{textnet_forward.1} parent=103 // pred_region
          %2390 = vsyncadd [#allocation5], 0
          %s2392 = sshll.u32 [#allocation21], 4
          %s2393 = int_to_ptr.vmem [resolvable:$true] %s2392
          %s2394 = sshll.u32 %s21, 4
          %s2395 = int_to_ptr.hbm [resolvable:$true] %s2394
          %2397 = dma.vmem_to_hbm [thread:$0]  %s2393, 32, %s2395, [#allocation5]
        $region172: #{textnet_forward.1} parent=103 // pred_fallthru
          _
        // Predicated region
        $region173: #{textnet_forward.1} parent=103 // pred_check
          %p2398 = pneg %p540
        $region174: #{textnet_forward.1} parent=103 // pred_check_branch
          %2400 = sbr.rel (%p2398) target = $region176
        $region175: #{textnet_forward.1} parent=103 // pred_region
          %2402 = dma.done [#allocation5], 32
        $region176: #{textnet_forward.1} parent=103 // pred_fallthru
          _
      $region104: #{textnet_forward.1} parent=5 // pred_fallthru
        _
      %p2403 = scmp.le.s32.totalorder 2, %s31
      // Predicated region
      $region177: #{textnet_forward.1} parent=5 // pred_check
        %p2404 = pneg %p2403
      $region178: #{textnet_forward.1} parent=5 // pred_check_branch
        %2406 = sbr.rel (%p2404) target = $region180
      $region179: #{textnet_forward.1} parent=5 // pred_region
        %s2407 = ssub.s32 %s31, 2
      $region180: #{textnet_forward.1} parent=5 // pred_fallthru
        _
    $region6: #{textnet_forward.1} parent=1 // loop_footer
      %s35 = sadd.s32 1, %s31
    $region7: #{textnet_forward.1} parent=1 // loop_footer_branch
      %30 = sbr.rel target = $region3
    $region8: #{textnet_forward.1} parent=1 // loop_exit
      _
    %2408 = vsyncpa [#allocation4], 1
    %s2409 = scalar_lea.sflag [#allocation4], 1
    %2410 = vsyncpa %s2409, 1
    %2411 = vsyncpa [#allocation7], 1
    %2412 = vsyncpa [#allocation10], 1
    %2413 = vsyncpa [#allocation5], 1
    %s2414 = scalar_lea.sflag [#allocation5], 1
    %2415 = vsyncpa %s2414, 1

</llo_original>
